<compile_context>
chip_gen: v7x
topology: tpu7x:2x2x1
jax: 0.10.0
libtpu: 0.0.40
codegen_flags: <defaults>
</compile_context>

<pallas_src>
import functools

import jax
import jax.numpy as jnp
import numpy as np
from jax.experimental import pallas as pl
from jax.experimental.pallas import tpu as pltpu

K = 7        # conv kernel size
PAD = 3      # "same" padding for k=7
LPAD = 8     # left halo offset in the conv2 scratch (sublane-aligned interior store)
LANE = 128   # lane width; channels are zero-padded up to a multiple of this


def _round_up(v, m):
    return ((v + m - 1) // m) * m


def residual_block_kernel(xa_ref, xb_ref, w1_ref, b1_ref, g1_ref, be1_ref,
                          w2_ref, b2_ref, w3_ref, b3_ref, g2_ref, be2_ref,
                          out_ref, ypad_ref, *, stride, downsample, eps):
    n, lout, cpo = out_ref.shape
    cpi = xa_ref.shape[2]
    m = n * lout
    inv_m = 1.0 / float(m)

    # ---- conv1 (k=7, stride) + bias + ReLU: one batched (M,Cpi)x(Cpi,Cpo) dot per tap --------
    def x_tap(k):
        if stride == 1:
            sl = xa_ref[:, k:k + lout, :]
        else:  # stride == 2: even taps read the even phase, odd taps the odd phase
            src = xa_ref if k % 2 == 0 else xb_ref
            off = k // 2
            sl = src[:, off:off + lout, :]
        return sl.reshape(m, cpi)

    acc = jnp.zeros((m, cpo), jnp.float32)
    for k in range(K):
        acc = acc + jnp.dot(x_tap(k), w1_ref[k * cpi:(k + 1) * cpi, :],
                            preferred_element_type=jnp.float32)
    y1 = jnp.maximum(acc + b1_ref[...], 0.0)

    # ---- bn1: fused single-pass batch statistics, normalization as one FMA --------------------
    mean1 = jnp.sum(y1, axis=0, keepdims=True) * inv_m
    var1 = jnp.sum(y1 * y1, axis=0, keepdims=True) * inv_m - mean1 * mean1
    s1 = jax.lax.rsqrt(var1 + eps) * g1_ref[...]          # (1, Cpo)
    t1 = be1_ref[...] - mean1 * s1                         # (1, Cpo)
    y1n = y1 * s1 + t1

    # ---- stash bn1 output in the conv2 halo buffer (bf16); zero only the halo rows ------------
    ypad_ref[:, LPAD - PAD:LPAD, :] = jnp.zeros((n, PAD, cpo), ypad_ref.dtype)
    ypad_ref[:, LPAD + lout:LPAD + lout + PAD, :] = jnp.zeros((n, PAD, cpo), ypad_ref.dtype)
    ypad_ref[:, LPAD:LPAD + lout, :] = y1n.reshape(n, lout, cpo).astype(ypad_ref.dtype)

    # ---- conv2 (k=7, stride 1) + bias ----------------------------------------------------------
    acc = jnp.zeros((m, cpo), jnp.float32)
    for k in range(K):
        yk = ypad_ref[:, LPAD - PAD + k:LPAD - PAD + k + lout, :].reshape(m, cpo)
        acc = acc + jnp.dot(yk, w2_ref[k * cpo:(k + 1) * cpo, :],
                            preferred_element_type=jnp.float32)
    acc = acc + b2_ref[...]

    # ---- residual branch -----------------------------------------------------------------------
    if downsample:
        # conv3: k=1, stride=2, no padding -> x[:, 2i, :] == odd phase of padded x at offset 1
        xs = xb_ref[:, 1:1 + lout, :].reshape(m, cpi)
        res = jnp.dot(xs, w3_ref[...], preferred_element_type=jnp.float32) + b3_ref[...]
    else:
        # identity (stride == 1, Cin == Cout): centre window of the padded input
        res = xa_ref[:, PAD:PAD + lout, :].reshape(m, cpi).astype(jnp.float32)

    y2 = jnp.maximum(res + acc, 0.0)

    # ---- bn2 ------------------------------------------------------------------------------------
    mean2 = jnp.sum(y2, axis=0, keepdims=True) * inv_m
    var2 = jnp.sum(y2 * y2, axis=0, keepdims=True) * inv_m - mean2 * mean2
    s2 = jax.lax.rsqrt(var2 + eps) * g2_ref[...]
    t2 = be2_ref[...] - mean2 * s2
    out_ref[...] = (y2 * s2 + t2).reshape(n, lout, cpo)


def residual_block(x, params, *, stride, downsample, eps=1e-5):
    """x: (N, Cin, L) float32 (PyTorch NCL layout). Returns (N, Cout, Lout) float32."""
    n, cin, l = x.shape
    cout = params["w1"].shape[0]

    if downsample:
        # nn.Conv1d(in, out, 1, stride=2): lengths only line up when conv1 stride is 2.
        assert stride == 2, "downsample=True implies stride=2 (conv3 is hard-coded stride 2)"
    else:
        assert stride == 1 and cin == cout, \
            "identity residual requires stride=1 and in_channels == out_channels"

    lout = (l + 2 * PAD - K) // stride + 1
    cpi = _round_up(cin, LANE)
    cpo = _round_up(cout, LANE)

    def pad_axis(a, size, axis):
        widths = [(0, 0)] * a.ndim
        widths[axis] = (0, size - a.shape[axis])
        return jnp.pad(a, widths)

    # ---- glue: layout conversion / zero-padding only; all math happens inside the kernel ----
    x_nlc = jnp.transpose(x, (0, 2, 1)).astype(jnp.float32)                  # (N, L, Cin)
    x_nlc = pad_axis(x_nlc, cpi, 2)                                          # (N, L, Cpi)
    xpad = jnp.pad(x_nlc, ((0, 0), (PAD, PAD), (0, 0))).astype(jnp.bfloat16)  # (N, L+6, Cpi)

    if stride == 2:
        xa = xpad[:, 0::2, :]                                                # even phase
        xb = xpad[:, 1::2, :]                                                # odd phase
    else:
        xa = xpad
        xb = xpad[:, :8, :]                                                  # placeholder, unused

    def conv_weight(w, ci, co):
        # torch (Cout, Cin, K) -> (K, Cin, Cout) -> zero-pad lanes -> flatten to (K*ci, co), bf16
        kcc = jnp.transpose(w, (2, 1, 0)).astype(jnp.float32)
        kcc = pad_axis(pad_axis(kcc, ci, 1), co, 2)
        return kcc.reshape(w.shape[2] * ci, co).astype(jnp.bfloat16)

    def chan_vec(p):
        return pad_axis(p.reshape(1, -1).astype(jnp.float32), cpo, 1)

    w1 = conv_weight(params["w1"], cpi, cpo)
    w2 = conv_weight(params["w2"], cpo, cpo)
    if downsample:
        w3c = jnp.transpose(params["w3"][:, :, 0], (1, 0)).astype(jnp.float32)  # (Cin, Cout)
        w3 = pad_axis(pad_axis(w3c, cpi, 0), cpo, 1).astype(jnp.bfloat16)
        b3 = chan_vec(params["b3"])
    else:
        w3 = jnp.zeros((cpi, cpo), jnp.bfloat16)
        b3 = jnp.zeros((1, cpo), jnp.float32)

    b1, g1, be1 = chan_vec(params["b1"]), chan_vec(params["g1"]), chan_vec(params["be1"])
    b2, g2, be2 = chan_vec(params["b2"]), chan_vec(params["g2"]), chan_vec(params["be2"])

    kernel = functools.partial(residual_block_kernel, stride=stride,
                               downsample=downsample, eps=eps)
    vmem = pl.BlockSpec(memory_space=pltpu.MemorySpace.VMEM)

    out_nlc = pl.pallas_call(
        kernel,
        out_shape=jax.ShapeDtypeStruct((n, lout, cpo), jnp.float32),
        in_specs=[vmem] * 12,
        out_specs=vmem,
        scratch_shapes=[pltpu.VMEM((n, LPAD + lout + 8, cpo), jnp.bfloat16)],  # conv2 halo buf
        compiler_params=pltpu.CompilerParams(vmem_limit_bytes=32 * 1024 * 1024),
    )(xa, xb, w1, b1, g1, be1, w2, b2, w3, b3, g2, be2)

    return jnp.transpose(out_nlc[:, :, :cout], (0, 2, 1))                    # (N, Cout, Lout)


# ------------------------- pure-JAX reference (for checking) -------------------------
def reference(x, params, *, stride, downsample, eps=1e-5):
    def conv1d(x, w, b, s, p):
        out = jax.lax.conv_general_dilated(
            x, w, window_strides=(s,), padding=[(p, p)],
            dimension_numbers=("NCH", "OIH", "NCH"),
            precision=jax.lax.Precision.HIGHEST)
        return out + b[None, :, None]

    def bn(x, g, be):
        mean = jnp.mean(x, axis=(0, 2), keepdims=True)
        var = jnp.mean((x - mean) ** 2, axis=(0, 2), keepdims=True)
        return (x - mean) / jnp.sqrt(var + eps) * g[None, :, None] + be[None, :, None]

    y = conv1d(x, params["w1"], params["b1"], stride, 3)
    y = jnp.maximum(y, 0.0)
    y = bn(y, params["g1"], params["be1"])
    y = conv1d(y, params["w2"], params["b2"], 1, 3)
    if downsample:
        x = conv1d(x, params["w3"], params["b3"], 2, 0)
    out = jnp.maximum(x + y, 0.0)
    return bn(out, params["g2"], params["be2"])


if __name__ == "__main__":
    ks = jax.random.split(jax.random.PRNGKey(0), 24)

    # ---- case 1: downsampling block (in=4, out=8, stride=2, 1x1 stride-2 residual conv) ----
    n, cin, cout, l = 2, 4, 8, 16
    params = {
        "w1": 0.2 * jax.random.normal(ks[0], (cout, cin, 7), jnp.float32),
        "b1": 0.1 * jax.random.normal(ks[1], (cout,), jnp.float32),
        "g1": 1.0 + 0.1 * jax.random.normal(ks[2], (cout,), jnp.float32),
        "be1": 0.1 * jax.random.normal(ks[3], (cout,), jnp.float32),
        "w2": 0.2 * jax.random.normal(ks[4], (cout, cout, 7), jnp.float32),
        "b2": 0.1 * jax.random.normal(ks[5], (cout,), jnp.float32),
        "w3": 0.2 * jax.random.normal(ks[6], (cout, cin, 1), jnp.float32),
        "b3": 0.1 * jax.random.normal(ks[7], (cout,), jnp.float32),
        "g2": 1.0 + 0.1 * jax.random.normal(ks[8], (cout,), jnp.float32),
        "be2": 0.1 * jax.random.normal(ks[9], (cout,), jnp.float32),
    }
    x = jax.random.normal(ks[10], (n, cin, l), jnp.float32)

    out = jax.block_until_ready(residual_block(x, params, stride=2, downsample=True))
    ref = reference(x, params, stride=2, downsample=True)
    assert out.shape == ref.shape, (out.shape, ref.shape)
    # bf16 MXU operands (fp32 accumulation) vs. an fp32 HIGHEST-precision reference:
    # tolerance sized for bf16 rounding through two conv+BN stages.
    np.testing.assert_allclose(np.asarray(out), np.asarray(ref), atol=3e-2, rtol=3e-2)

    # ---- case 2: identity block (in=out=8, stride=1, no downsample) ----
    n2, c2, l2 = 2, 8, 16
    params2 = {
        "w1": 0.2 * jax.random.normal(ks[11], (c2, c2, 7), jnp.float32),
        "b1": 0.1 * jax.random.normal(ks[12], (c2,), jnp.float32),
        "g1": 1.0 + 0.1 * jax.random.normal(ks[13], (c2,), jnp.float32),
        "be1": 0.1 * jax.random.normal(ks[14], (c2,), jnp.float32),
        "w2": 0.2 * jax.random.normal(ks[15], (c2, c2, 7), jnp.float32),
        "b2": 0.1 * jax.random.normal(ks[16], (c2,), jnp.float32),
        "g2": 1.0 + 0.1 * jax.random.normal(ks[17], (c2,), jnp.float32),
        "be2": 0.1 * jax.random.normal(ks[18], (c2,), jnp.float32),
    }
    x2 = jax.random.normal(ks[19], (n2, c2, l2), jnp.float32)

    out2 = jax.block_until_ready(residual_block(x2, params2, stride=1, downsample=False))
    ref2 = reference(x2, params2, stride=1, downsample=False)
    assert out2.shape == ref2.shape, (out2.shape, ref2.shape)
    np.testing.assert_allclose(np.asarray(out2), np.asarray(ref2), atol=3e-2, rtol=3e-2)

    print("KERNEL_OK")
</pallas_src>

<mosaic_0001>
module attributes {stable_mosaic.version = 11 : i64} {
  func.func @residual_block_kernel(%arg0: memref<2x11x128xbf16, #tpu.memory_space<vmem>>, %arg1: memref<2x11x128xbf16, #tpu.memory_space<vmem>>, %arg2: memref<896x128xbf16, #tpu.memory_space<vmem>>, %arg3: memref<1x128xf32, #tpu.memory_space<vmem>>, %arg4: memref<1x128xf32, #tpu.memory_space<vmem>>, %arg5: memref<1x128xf32, #tpu.memory_space<vmem>>, %arg6: memref<896x128xbf16, #tpu.memory_space<vmem>>, %arg7: memref<1x128xf32, #tpu.memory_space<vmem>>, %arg8: memref<128x128xbf16, #tpu.memory_space<vmem>>, %arg9: memref<1x128xf32, #tpu.memory_space<vmem>>, %arg10: memref<1x128xf32, #tpu.memory_space<vmem>>, %arg11: memref<1x128xf32, #tpu.memory_space<vmem>>, %arg12: memref<2x8x128xf32, #tpu.memory_space<vmem>>, %arg13: memref<2x24x128xbf16, #tpu.memory_space<vmem>>) attributes {dimension_semantics = [], scalar_prefetch = 0 : i64, scratch_operands = 1 : i64, tpu.core_type = #tpu.core_type<tc>} {
    %cst = arith.constant 0.000000e+00 : f32
    %0 = vector.broadcast %cst : f32 to vector<16x128xf32>
    %c0 = arith.constant 0 : index
    %c0_0 = arith.constant 0 : index
    %c0_1 = arith.constant 0 : index
    %1 = vector.load %arg0[%c0, %c0_0, %c0_1] : memref<2x11x128xbf16, #tpu.memory_space<vmem>>, vector<2x8x128xbf16>
    %2 = vector.shape_cast %1 : vector<2x8x128xbf16> to vector<16x128xbf16>
    %c0_2 = arith.constant 0 : index
    %c0_3 = arith.constant 0 : index
    %3 = vector.load %arg2[%c0_2, %c0_3] : memref<896x128xbf16, #tpu.memory_space<vmem>>, vector<128x128xbf16>
    %cst_4 = arith.constant dense<0.000000e+00> : vector<16x128xf32>
    %4 = tpu.matmul %2, %3, %cst_4 {dimension_numbers = #tpu.dot_dimension_numbers<[1], [0], [0], [1], [0, 0, 1, 1], [], []>} : vector<16x128xbf16>, vector<128x128xbf16>, vector<16x128xf32> -> vector<16x128xf32>
    %5 = arith.addf %0, %4 : vector<16x128xf32>
    %c0_5 = arith.constant 0 : index
    %c0_6 = arith.constant 0 : index
    %c0_7 = arith.constant 0 : index
    %6 = vector.load %arg1[%c0_5, %c0_6, %c0_7] : memref<2x11x128xbf16, #tpu.memory_space<vmem>>, vector<2x8x128xbf16>
    %7 = vector.shape_cast %6 : vector<2x8x128xbf16> to vector<16x128xbf16>
    %c128 = arith.constant 128 : index
    %c0_8 = arith.constant 0 : index
    %8 = vector.load %arg2[%c128, %c0_8] : memref<896x128xbf16, #tpu.memory_space<vmem>>, vector<128x128xbf16>
    %cst_9 = arith.constant dense<0.000000e+00> : vector<16x128xf32>
    %9 = tpu.matmul %7, %8, %cst_9 {dimension_numbers = #tpu.dot_dimension_numbers<[1], [0], [0], [1], [0, 0, 1, 1], [], []>} : vector<16x128xbf16>, vector<128x128xbf16>, vector<16x128xf32> -> vector<16x128xf32>
    %10 = arith.addf %5, %9 : vector<16x128xf32>
    %c0_10 = arith.constant 0 : index
    %c1 = arith.constant 1 : index
    %c0_11 = arith.constant 0 : index
    %11 = vector.load %arg0[%c0_10, %c1, %c0_11] : memref<2x11x128xbf16, #tpu.memory_space<vmem>>, vector<2x8x128xbf16>
    %12 = vector.shape_cast %11 : vector<2x8x128xbf16> to vector<16x128xbf16>
    %c256 = arith.constant 256 : index
    %c0_12 = arith.constant 0 : index
    %13 = vector.load %arg2[%c256, %c0_12] : memref<896x128xbf16, #tpu.memory_space<vmem>>, vector<128x128xbf16>
    %cst_13 = arith.constant dense<0.000000e+00> : vector<16x128xf32>
    %14 = tpu.matmul %12, %13, %cst_13 {dimension_numbers = #tpu.dot_dimension_numbers<[1], [0], [0], [1], [0, 0, 1, 1], [], []>} : vector<16x128xbf16>, vector<128x128xbf16>, vector<16x128xf32> -> vector<16x128xf32>
    %15 = arith.addf %10, %14 : vector<16x128xf32>
    %c0_14 = arith.constant 0 : index
    %c1_15 = arith.constant 1 : index
    %c0_16 = arith.constant 0 : index
    %16 = vector.load %arg1[%c0_14, %c1_15, %c0_16] : memref<2x11x128xbf16, #tpu.memory_space<vmem>>, vector<2x8x128xbf16>
    %17 = vector.shape_cast %16 : vector<2x8x128xbf16> to vector<16x128xbf16>
    %c384 = arith.constant 384 : index
    %c0_17 = arith.constant 0 : index
    %18 = vector.load %arg2[%c384, %c0_17] : memref<896x128xbf16, #tpu.memory_space<vmem>>, vector<128x128xbf16>
    %cst_18 = arith.constant dense<0.000000e+00> : vector<16x128xf32>
    %19 = tpu.matmul %17, %18, %cst_18 {dimension_numbers = #tpu.dot_dimension_numbers<[1], [0], [0], [1], [0, 0, 1, 1], [], []>} : vector<16x128xbf16>, vector<128x128xbf16>, vector<16x128xf32> -> vector<16x128xf32>
    %20 = arith.addf %15, %19 : vector<16x128xf32>
    %c0_19 = arith.constant 0 : index
    %c2 = arith.constant 2 : index
    %c0_20 = arith.constant 0 : index
    %21 = vector.load %arg0[%c0_19, %c2, %c0_20] : memref<2x11x128xbf16, #tpu.memory_space<vmem>>, vector<2x8x128xbf16>
    %22 = vector.shape_cast %21 : vector<2x8x128xbf16> to vector<16x128xbf16>
    %c512 = arith.constant 512 : index
    %c0_21 = arith.constant 0 : index
    %23 = vector.load %arg2[%c512, %c0_21] : memref<896x128xbf16, #tpu.memory_space<vmem>>, vector<128x128xbf16>
    %cst_22 = arith.constant dense<0.000000e+00> : vector<16x128xf32>
    %24 = tpu.matmul %22, %23, %cst_22 {dimension_numbers = #tpu.dot_dimension_numbers<[1], [0], [0], [1], [0, 0, 1, 1], [], []>} : vector<16x128xbf16>, vector<128x128xbf16>, vector<16x128xf32> -> vector<16x128xf32>
    %25 = arith.addf %20, %24 : vector<16x128xf32>
    %c0_23 = arith.constant 0 : index
    %c2_24 = arith.constant 2 : index
    %c0_25 = arith.constant 0 : index
    %26 = vector.load %arg1[%c0_23, %c2_24, %c0_25] : memref<2x11x128xbf16, #tpu.memory_space<vmem>>, vector<2x8x128xbf16>
    %27 = vector.shape_cast %26 : vector<2x8x128xbf16> to vector<16x128xbf16>
    %c640 = arith.constant 640 : index
    %c0_26 = arith.constant 0 : index
    %28 = vector.load %arg2[%c640, %c0_26] : memref<896x128xbf16, #tpu.memory_space<vmem>>, vector<128x128xbf16>
    %cst_27 = arith.constant dense<0.000000e+00> : vector<16x128xf32>
    %29 = tpu.matmul %27, %28, %cst_27 {dimension_numbers = #tpu.dot_dimension_numbers<[1], [0], [0], [1], [0, 0, 1, 1], [], []>} : vector<16x128xbf16>, vector<128x128xbf16>, vector<16x128xf32> -> vector<16x128xf32>
    %30 = arith.addf %25, %29 : vector<16x128xf32>
    %c0_28 = arith.constant 0 : index
    %c3 = arith.constant 3 : index
    %c0_29 = arith.constant 0 : index
    %31 = vector.load %arg0[%c0_28, %c3, %c0_29] : memref<2x11x128xbf16, #tpu.memory_space<vmem>>, vector<2x8x128xbf16>
    %32 = vector.shape_cast %31 : vector<2x8x128xbf16> to vector<16x128xbf16>
    %c768 = arith.constant 768 : index
    %c0_30 = arith.constant 0 : index
    %33 = vector.load %arg2[%c768, %c0_30] : memref<896x128xbf16, #tpu.memory_space<vmem>>, vector<128x128xbf16>
    %cst_31 = arith.constant dense<0.000000e+00> : vector<16x128xf32>
    %34 = tpu.matmul %32, %33, %cst_31 {dimension_numbers = #tpu.dot_dimension_numbers<[1], [0], [0], [1], [0, 0, 1, 1], [], []>} : vector<16x128xbf16>, vector<128x128xbf16>, vector<16x128xf32> -> vector<16x128xf32>
    %35 = arith.addf %30, %34 : vector<16x128xf32>
    %c0_32 = arith.constant 0 : index
    %c0_33 = arith.constant 0 : index
    %36 = vector.load %arg3[%c0_32, %c0_33] : memref<1x128xf32, #tpu.memory_space<vmem>>, vector<1x128xf32>
    %37 = vector.broadcast %36 : vector<1x128xf32> to vector<16x128xf32>
    %38 = arith.addf %35, %37 : vector<16x128xf32>
    %cst_34 = arith.constant 0.000000e+00 : f32
    %39 = vector.broadcast %cst_34 : f32 to vector<16x128xf32>
    %40 = arith.maximumf %38, %39 : vector<16x128xf32>
    %cst_35 = arith.constant dense<0.000000e+00> : vector<128xf32>
    %41 = vector.multi_reduction <add>, %40, %cst_35 [0] : vector<16x128xf32> to vector<128xf32>
    %42 = vector.shape_cast %41 : vector<128xf32> to vector<1x128xf32>
    %cst_36 = arith.constant 6.250000e-02 : f32
    %43 = vector.broadcast %cst_36 : f32 to vector<1x128xf32>
    %44 = arith.mulf %42, %43 : vector<1x128xf32>
    %45 = arith.mulf %40, %40 : vector<16x128xf32>
    %cst_37 = arith.constant dense<0.000000e+00> : vector<128xf32>
    %46 = vector.multi_reduction <add>, %45, %cst_37 [0] : vector<16x128xf32> to vector<128xf32>
    %47 = vector.shape_cast %46 : vector<128xf32> to vector<1x128xf32>
    %cst_38 = arith.constant 6.250000e-02 : f32
    %48 = vector.broadcast %cst_38 : f32 to vector<1x128xf32>
    %49 = arith.mulf %47, %48 : vector<1x128xf32>
    %50 = arith.mulf %44, %44 : vector<1x128xf32>
    %51 = arith.subf %49, %50 : vector<1x128xf32>
    %cst_39 = arith.constant 9.99999974E-6 : f32
    %52 = vector.broadcast %cst_39 : f32 to vector<1x128xf32>
    %53 = arith.addf %51, %52 : vector<1x128xf32>
    %54 = math.rsqrt %53 : vector<1x128xf32>
    %c0_40 = arith.constant 0 : index
    %c0_41 = arith.constant 0 : index
    %55 = vector.load %arg4[%c0_40, %c0_41] : memref<1x128xf32, #tpu.memory_space<vmem>>, vector<1x128xf32>
    %56 = arith.mulf %54, %55 : vector<1x128xf32>
    %c0_42 = arith.constant 0 : index
    %c0_43 = arith.constant 0 : index
    %57 = vector.load %arg5[%c0_42, %c0_43] : memref<1x128xf32, #tpu.memory_space<vmem>>, vector<1x128xf32>
    %58 = arith.mulf %44, %56 : vector<1x128xf32>
    %59 = arith.subf %57, %58 : vector<1x128xf32>
    %60 = vector.broadcast %56 : vector<1x128xf32> to vector<16x128xf32>
    %61 = arith.mulf %40, %60 : vector<16x128xf32>
    %62 = vector.broadcast %59 : vector<1x128xf32> to vector<16x128xf32>
    %63 = arith.addf %61, %62 : vector<16x128xf32>
    %cst_44 = arith.constant 0.000000e+00 : bf16
    %64 = vector.broadcast %cst_44 : bf16 to vector<2x3x128xbf16>
    %c0_45 = arith.constant 0 : index
    %c5 = arith.constant 5 : index
    %c0_46 = arith.constant 0 : index
    %65 = vector.load %arg13[%c0_45, %c5, %c0_46] : memref<2x24x128xbf16, #tpu.memory_space<vmem>>, vector<2x3x128xbf16>
    tpu.vector_store %arg13[%c0_45, %c5, %c0_46], %64 {strides = array<i32>} : memref<2x24x128xbf16, #tpu.memory_space<vmem>>, vector<2x3x128xbf16>,
    %cst_47 = arith.constant 0.000000e+00 : bf16
    %66 = vector.broadcast %cst_47 : bf16 to vector<2x3x128xbf16>
    %c0_48 = arith.constant 0 : index
    %c16 = arith.constant 16 : index
    %c0_49 = arith.constant 0 : index
    %67 = vector.load %arg13[%c0_48, %c16, %c0_49] : memref<2x24x128xbf16, #tpu.memory_space<vmem>>, vector<2x3x128xbf16>
    tpu.vector_store %arg13[%c0_48, %c16, %c0_49], %66 {strides = array<i32>} : memref<2x24x128xbf16, #tpu.memory_space<vmem>>, vector<2x3x128xbf16>,
    %68 = vector.shape_cast %63 : vector<16x128xf32> to vector<2x8x128xf32>
    %69 = arith.truncf %68 : vector<2x8x128xf32> to vector<2x8x128xbf16>
    %c0_50 = arith.constant 0 : index
    %c8 = arith.constant 8 : index
    %c0_51 = arith.constant 0 : index
    %70 = vector.load %arg13[%c0_50, %c8, %c0_51] : memref<2x24x128xbf16, #tpu.memory_space<vmem>>, vector<2x8x128xbf16>
    tpu.vector_store %arg13[%c0_50, %c8, %c0_51], %69 {strides = array<i32>} : memref<2x24x128xbf16, #tpu.memory_space<vmem>>, vector<2x8x128xbf16>,
    %cst_52 = arith.constant 0.000000e+00 : f32
    %71 = vector.broadcast %cst_52 : f32 to vector<16x128xf32>
    %c0_53 = arith.constant 0 : index
    %c5_54 = arith.constant 5 : index
    %c0_55 = arith.constant 0 : index
    %72 = vector.load %arg13[%c0_53, %c5_54, %c0_55] : memref<2x24x128xbf16, #tpu.memory_space<vmem>>, vector<2x8x128xbf16>
    %73 = vector.shape_cast %72 : vector<2x8x128xbf16> to vector<16x128xbf16>
    %c0_56 = arith.constant 0 : index
    %c0_57 = arith.constant 0 : index
    %74 = vector.load %arg6[%c0_56, %c0_57] : memref<896x128xbf16, #tpu.memory_space<vmem>>, vector<128x128xbf16>
    %cst_58 = arith.constant dense<0.000000e+00> : vector<16x128xf32>
    %75 = tpu.matmul %73, %74, %cst_58 {dimension_numbers = #tpu.dot_dimension_numbers<[1], [0], [0], [1], [0, 0, 1, 1], [], []>} : vector<16x128xbf16>, vector<128x128xbf16>, vector<16x128xf32> -> vector<16x128xf32>
    %76 = arith.addf %71, %75 : vector<16x128xf32>
    %c0_59 = arith.constant 0 : index
    %c6 = arith.constant 6 : index
    %c0_60 = arith.constant 0 : index
    %77 = vector.load %arg13[%c0_59, %c6, %c0_60] : memref<2x24x128xbf16, #tpu.memory_space<vmem>>, vector<2x8x128xbf16>
    %78 = vector.shape_cast %77 : vector<2x8x128xbf16> to vector<16x128xbf16>
    %c128_61 = arith.constant 128 : index
    %c0_62 = arith.constant 0 : index
    %79 = vector.load %arg6[%c128_61, %c0_62] : memref<896x128xbf16, #tpu.memory_space<vmem>>, vector<128x128xbf16>
    %cst_63 = arith.constant dense<0.000000e+00> : vector<16x128xf32>
    %80 = tpu.matmul %78, %79, %cst_63 {dimension_numbers = #tpu.dot_dimension_numbers<[1], [0], [0], [1], [0, 0, 1, 1], [], []>} : vector<16x128xbf16>, vector<128x128xbf16>, vector<16x128xf32> -> vector<16x128xf32>
    %81 = arith.addf %76, %80 : vector<16x128xf32>
    %c0_64 = arith.constant 0 : index
    %c7 = arith.constant 7 : index
    %c0_65 = arith.constant 0 : index
    %82 = vector.load %arg13[%c0_64, %c7, %c0_65] : memref<2x24x128xbf16, #tpu.memory_space<vmem>>, vector<2x8x128xbf16>
    %83 = vector.shape_cast %82 : vector<2x8x128xbf16> to vector<16x128xbf16>
    %c256_66 = arith.constant 256 : index
    %c0_67 = arith.constant 0 : index
    %84 = vector.load %arg6[%c256_66, %c0_67] : memref<896x128xbf16, #tpu.memory_space<vmem>>, vector<128x128xbf16>
    %cst_68 = arith.constant dense<0.000000e+00> : vector<16x128xf32>
    %85 = tpu.matmul %83, %84, %cst_68 {dimension_numbers = #tpu.dot_dimension_numbers<[1], [0], [0], [1], [0, 0, 1, 1], [], []>} : vector<16x128xbf16>, vector<128x128xbf16>, vector<16x128xf32> -> vector<16x128xf32>
    %86 = arith.addf %81, %85 : vector<16x128xf32>
    %c0_69 = arith.constant 0 : index
    %c8_70 = arith.constant 8 : index
    %c0_71 = arith.constant 0 : index
    %87 = vector.load %arg13[%c0_69, %c8_70, %c0_71] : memref<2x24x128xbf16, #tpu.memory_space<vmem>>, vector<2x8x128xbf16>
    %88 = vector.shape_cast %87 : vector<2x8x128xbf16> to vector<16x128xbf16>
    %c384_72 = arith.constant 384 : index
    %c0_73 = arith.constant 0 : index
    %89 = vector.load %arg6[%c384_72, %c0_73] : memref<896x128xbf16, #tpu.memory_space<vmem>>, vector<128x128xbf16>
    %cst_74 = arith.constant dense<0.000000e+00> : vector<16x128xf32>
    %90 = tpu.matmul %88, %89, %cst_74 {dimension_numbers = #tpu.dot_dimension_numbers<[1], [0], [0], [1], [0, 0, 1, 1], [], []>} : vector<16x128xbf16>, vector<128x128xbf16>, vector<16x128xf32> -> vector<16x128xf32>
    %91 = arith.addf %86, %90 : vector<16x128xf32>
    %c0_75 = arith.constant 0 : index
    %c9 = arith.constant 9 : index
    %c0_76 = arith.constant 0 : index
    %92 = vector.load %arg13[%c0_75, %c9, %c0_76] : memref<2x24x128xbf16, #tpu.memory_space<vmem>>, vector<2x8x128xbf16>
    %93 = vector.shape_cast %92 : vector<2x8x128xbf16> to vector<16x128xbf16>
    %c512_77 = arith.constant 512 : index
    %c0_78 = arith.constant 0 : index
    %94 = vector.load %arg6[%c512_77, %c0_78] : memref<896x128xbf16, #tpu.memory_space<vmem>>, vector<128x128xbf16>
    %cst_79 = arith.constant dense<0.000000e+00> : vector<16x128xf32>
    %95 = tpu.matmul %93, %94, %cst_79 {dimension_numbers = #tpu.dot_dimension_numbers<[1], [0], [0], [1], [0, 0, 1, 1], [], []>} : vector<16x128xbf16>, vector<128x128xbf16>, vector<16x128xf32> -> vector<16x128xf32>
    %96 = arith.addf %91, %95 : vector<16x128xf32>
    %c0_80 = arith.constant 0 : index
    %c10 = arith.constant 10 : index
    %c0_81 = arith.constant 0 : index
    %97 = vector.load %arg13[%c0_80, %c10, %c0_81] : memref<2x24x128xbf16, #tpu.memory_space<vmem>>, vector<2x8x128xbf16>
    %98 = vector.shape_cast %97 : vector<2x8x128xbf16> to vector<16x128xbf16>
    %c640_82 = arith.constant 640 : index
    %c0_83 = arith.constant 0 : index
    %99 = vector.load %arg6[%c640_82, %c0_83] : memref<896x128xbf16, #tpu.memory_space<vmem>>, vector<128x128xbf16>
    %cst_84 = arith.constant dense<0.000000e+00> : vector<16x128xf32>
    %100 = tpu.matmul %98, %99, %cst_84 {dimension_numbers = #tpu.dot_dimension_numbers<[1], [0], [0], [1], [0, 0, 1, 1], [], []>} : vector<16x128xbf16>, vector<128x128xbf16>, vector<16x128xf32> -> vector<16x128xf32>
    %101 = arith.addf %96, %100 : vector<16x128xf32>
    %c0_85 = arith.constant 0 : index
    %c11 = arith.constant 11 : index
    %c0_86 = arith.constant 0 : index
    %102 = vector.load %arg13[%c0_85, %c11, %c0_86] : memref<2x24x128xbf16, #tpu.memory_space<vmem>>, vector<2x8x128xbf16>
    %103 = vector.shape_cast %102 : vector<2x8x128xbf16> to vector<16x128xbf16>
    %c768_87 = arith.constant 768 : index
    %c0_88 = arith.constant 0 : index
    %104 = vector.load %arg6[%c768_87, %c0_88] : memref<896x128xbf16, #tpu.memory_space<vmem>>, vector<128x128xbf16>
    %cst_89 = arith.constant dense<0.000000e+00> : vector<16x128xf32>
    %105 = tpu.matmul %103, %104, %cst_89 {dimension_numbers = #tpu.dot_dimension_numbers<[1], [0], [0], [1], [0, 0, 1, 1], [], []>} : vector<16x128xbf16>, vector<128x128xbf16>, vector<16x128xf32> -> vector<16x128xf32>
    %106 = arith.addf %101, %105 : vector<16x128xf32>
    %c0_90 = arith.constant 0 : index
    %c0_91 = arith.constant 0 : index
    %107 = vector.load %arg7[%c0_90, %c0_91] : memref<1x128xf32, #tpu.memory_space<vmem>>, vector<1x128xf32>
    %108 = vector.broadcast %107 : vector<1x128xf32> to vector<16x128xf32>
    %109 = arith.addf %106, %108 : vector<16x128xf32>
    %c0_92 = arith.constant 0 : index
    %c1_93 = arith.constant 1 : index
    %c0_94 = arith.constant 0 : index
    %110 = vector.load %arg1[%c0_92, %c1_93, %c0_94] : memref<2x11x128xbf16, #tpu.memory_space<vmem>>, vector<2x8x128xbf16>
    %111 = vector.shape_cast %110 : vector<2x8x128xbf16> to vector<16x128xbf16>
    %c0_95 = arith.constant 0 : index
    %c0_96 = arith.constant 0 : index
    %112 = vector.load %arg8[%c0_95, %c0_96] : memref<128x128xbf16, #tpu.memory_space<vmem>>, vector<128x128xbf16>
    %cst_97 = arith.constant dense<0.000000e+00> : vector<16x128xf32>
    %113 = tpu.matmul %111, %112, %cst_97 {dimension_numbers = #tpu.dot_dimension_numbers<[1], [0], [0], [1], [0, 0, 1, 1], [], []>} : vector<16x128xbf16>, vector<128x128xbf16>, vector<16x128xf32> -> vector<16x128xf32>
    %c0_98 = arith.constant 0 : index
    %c0_99 = arith.constant 0 : index
    %114 = vector.load %arg9[%c0_98, %c0_99] : memref<1x128xf32, #tpu.memory_space<vmem>>, vector<1x128xf32>
    %115 = vector.broadcast %114 : vector<1x128xf32> to vector<16x128xf32>
    %116 = arith.addf %113, %115 : vector<16x128xf32>
    %117 = arith.addf %116, %109 : vector<16x128xf32>
    %cst_100 = arith.constant 0.000000e+00 : f32
    %118 = vector.broadcast %cst_100 : f32 to vector<16x128xf32>
    %119 = arith.maximumf %117, %118 : vector<16x128xf32>
    %cst_101 = arith.constant dense<0.000000e+00> : vector<128xf32>
    %120 = vector.multi_reduction <add>, %119, %cst_101 [0] : vector<16x128xf32> to vector<128xf32>
    %121 = vector.shape_cast %120 : vector<128xf32> to vector<1x128xf32>
    %cst_102 = arith.constant 6.250000e-02 : f32
    %122 = vector.broadcast %cst_102 : f32 to vector<1x128xf32>
    %123 = arith.mulf %121, %122 : vector<1x128xf32>
    %124 = arith.mulf %119, %119 : vector<16x128xf32>
    %cst_103 = arith.constant dense<0.000000e+00> : vector<128xf32>
    %125 = vector.multi_reduction <add>, %124, %cst_103 [0] : vector<16x128xf32> to vector<128xf32>
    %126 = vector.shape_cast %125 : vector<128xf32> to vector<1x128xf32>
    %cst_104 = arith.constant 6.250000e-02 : f32
    %127 = vector.broadcast %cst_104 : f32 to vector<1x128xf32>
    %128 = arith.mulf %126, %127 : vector<1x128xf32>
    %129 = arith.mulf %123, %123 : vector<1x128xf32>
    %130 = arith.subf %128, %129 : vector<1x128xf32>
    %cst_105 = arith.constant 9.99999974E-6 : f32
    %131 = vector.broadcast %cst_105 : f32 to vector<1x128xf32>
    %132 = arith.addf %130, %131 : vector<1x128xf32>
    %133 = math.rsqrt %132 : vector<1x128xf32>
    %c0_106 = arith.constant 0 : index
    %c0_107 = arith.constant 0 : index
    %134 = vector.load %arg10[%c0_106, %c0_107] : memref<1x128xf32, #tpu.memory_space<vmem>>, vector<1x128xf32>
    %135 = arith.mulf %133, %134 : vector<1x128xf32>
    %c0_108 = arith.constant 0 : index
    %c0_109 = arith.constant 0 : index
    %136 = vector.load %arg11[%c0_108, %c0_109] : memref<1x128xf32, #tpu.memory_space<vmem>>, vector<1x128xf32>
    %137 = arith.mulf %123, %135 : vector<1x128xf32>
    %138 = arith.subf %136, %137 : vector<1x128xf32>
    %139 = vector.broadcast %135 : vector<1x128xf32> to vector<16x128xf32>
    %140 = arith.mulf %119, %139 : vector<16x128xf32>
    %141 = vector.broadcast %138 : vector<1x128xf32> to vector<16x128xf32>
    %142 = arith.addf %140, %141 : vector<16x128xf32>
    %143 = vector.shape_cast %142 : vector<16x128xf32> to vector<2x8x128xf32>
    %c0_110 = arith.constant 0 : index
    %c0_111 = arith.constant 0 : index
    %c0_112 = arith.constant 0 : index
    %144 = vector.load %arg12[%c0_110, %c0_111, %c0_112] : memref<2x8x128xf32, #tpu.memory_space<vmem>>, vector<2x8x128xf32>
    tpu.vector_store %arg12[%c0_110, %c0_111, %c0_112], %143 {strides = array<i32>} : memref<2x8x128xf32, #tpu.memory_space<vmem>>, vector<2x8x128xf32>,
    return
  }
}

</mosaic_0001>

<llo_original>
// kernel: tpu_custom_call.1
$region0: #{tpu_custom_call.1}
  #allocation0 [shape = 'u32[]', space=smem, size = 0x4, offset = 0x4, fixed_abs, tag = 'smem constant byte address 0x4 - core index']
  #allocation1 [shape = 'u32[144,128]{1,0:T(1,128)}', space=vmem, size = 0x12000, scoped, tag = 'internal scratch']
  #allocation2 [shape = 'bf16[2,24,128]{2,1,0:T(8,128)(2,1)}', space=vmem, size = 0x3000, scoped, tag = 'scratch operand']
  %s0 = inlined_call_operand.vmem [shape: bf16[2,11,128], index: 0, kind: input, shape index: {}]
  %s1 = inlined_call_operand.vmem [shape: bf16[2,11,128], index: 1, kind: input, shape index: {}]
  %s2 = inlined_call_operand.hbm [shape: bf16[896,128], index: 2, kind: input, shape index: {}]
  %s3 = inlined_call_operand.vmem [shape: f32[1,128], index: 3, kind: input, shape index: {}]
  %s4 = inlined_call_operand.vmem [shape: f32[1,128], index: 4, kind: input, shape index: {}]
  %s5 = inlined_call_operand.vmem [shape: f32[1,128], index: 5, kind: input, shape index: {}]
  %s6 = inlined_call_operand.hbm [shape: bf16[896,128], index: 6, kind: input, shape index: {}]
  %s7 = inlined_call_operand.vmem [shape: f32[1,128], index: 7, kind: input, shape index: {}]
  %s8 = inlined_call_operand.vmem [shape: bf16[128,128], index: 8, kind: input, shape index: {}]
  %s9 = inlined_call_operand.vmem [shape: f32[1,128], index: 9, kind: input, shape index: {}]
  %s10 = inlined_call_operand.vmem [shape: f32[1,128], index: 10, kind: input, shape index: {}]
  %s11 = inlined_call_operand.vmem [shape: f32[1,128], index: 11, kind: input, shape index: {}]
  %s12 = inlined_call_operand.hbm [shape: f32[2,8,128], index: 12, kind: output, shape index: {}]
  %s13 = sld [smem:[#allocation0]]
  $region66: #{tpu_custom_call.1} parent=0
    _
  %s15 = ssub.s32 1, %s13
  %s16 = scalar_select 0, %s15, %s13
  $region1: #{tpu_custom_call.1} parent=0
    #allocation3 [shape = 'u8[229376]{0}', space=vmem, size = 0x38000, scoped, tag = 'input window, operand 2, single buffered']
    #allocation4 [shape = 's32[1]{0}', space=sflag, size = 0x4, scoped, tag = 'scoped memory for tpu_custom_call.1']
    #allocation5 [shape = 's32[1]{0}', space=sflag, size = 0x4, scoped, tag = 'scoped memory for tpu_custom_call.1']
    #allocation6 [shape = 'u8[229376]{0}', space=vmem, size = 0x38000, scoped, tag = 'input window, operand 6, single buffered']
    #allocation7 [shape = 's32[1]{0}', space=sflag, size = 0x4, scoped, tag = 'scoped memory for tpu_custom_call.1']
    #allocation8 [shape = 'u8[8192]{0}', space=vmem, size = 0x2000, scoped, tag = 'output window, operand 0, single buffered']
    %17 = vsyncpa [#allocation4], 0
    %18 = vsyncpa [#allocation7], 0
    %19 = vsyncpa [#allocation5], 0
    // Predicated region
    $region2: #{tpu_custom_call.1} parent=1 // pred_check
      _
    $region3: #{tpu_custom_call.1} parent=1 // pred_check_branch
      %21 = sbr.rel (0) target = $region5
    $region4: #{tpu_custom_call.1} parent=1 // pred_region
      _
    $region5: #{tpu_custom_call.1} parent=1 // pred_fallthru
      _
    // Predicated region
    $region6: #{tpu_custom_call.1} parent=1 // pred_check
      _
    $region7: #{tpu_custom_call.1} parent=1 // pred_check_branch
      %23 = sbr.rel (0) target = $region9
    $region8: #{tpu_custom_call.1} parent=1 // pred_region
      _
    $region9: #{tpu_custom_call.1} parent=1 // pred_fallthru
      _
    // Predicated region
    $region10: #{tpu_custom_call.1} parent=1 // pred_check
      _
    $region11: #{tpu_custom_call.1} parent=1 // pred_check_branch
      %25 = sbr.rel (0) target = $region13
    $region12: #{tpu_custom_call.1} parent=1 // pred_region
      %s27 = ssub.s32 7168, 7168
      %28 = vsyncadd [#allocation4], %s27
      %s29 = sshll.u32 [#allocation3], 4
      %s30 = int_to_ptr.vmem [resolvable:$true] %s29
      %35 = dma.hbm_to_vmem [thread:$0]  %s2, 7168, %s30, [#allocation4], 64, 64, 4
    $region13: #{tpu_custom_call.1} parent=1 // pred_fallthru
      _
    // Predicated region
    $region14: #{tpu_custom_call.1} parent=1 // pred_check
      _
    $region15: #{tpu_custom_call.1} parent=1 // pred_check_branch
      %37 = sbr.rel (0) target = $region17
    $region16: #{tpu_custom_call.1} parent=1 // pred_region
      _
    $region17: #{tpu_custom_call.1} parent=1 // pred_fallthru
      _
    // Predicated region
    $region18: #{tpu_custom_call.1} parent=1 // pred_check
      _
    $region19: #{tpu_custom_call.1} parent=1 // pred_check_branch
      %39 = sbr.rel (0) target = $region21
    $region20: #{tpu_custom_call.1} parent=1 // pred_region
      _
    $region21: #{tpu_custom_call.1} parent=1 // pred_fallthru
      _
    // Predicated region
    $region22: #{tpu_custom_call.1} parent=1 // pred_check
      _
    $region23: #{tpu_custom_call.1} parent=1 // pred_check_branch
      %41 = sbr.rel (0) target = $region25
    $region24: #{tpu_custom_call.1} parent=1 // pred_region
      _
    $region25: #{tpu_custom_call.1} parent=1 // pred_fallthru
      _
    // Predicated region
    $region26: #{tpu_custom_call.1} parent=1 // pred_check
      _
    $region27: #{tpu_custom_call.1} parent=1 // pred_check_branch
      %43 = sbr.rel (0) target = $region29
    $region28: #{tpu_custom_call.1} parent=1 // pred_region
      %s45 = ssub.s32 7168, 7168
      %46 = vsyncadd [#allocation7], %s45
      %s47 = sshll.u32 [#allocation6], 4
      %s48 = int_to_ptr.vmem [resolvable:$true] %s47
      %53 = dma.hbm_to_vmem [thread:$0]  %s6, 7168, %s48, [#allocation7], 64, 64, 4
    $region29: #{tpu_custom_call.1} parent=1 // pred_fallthru
      _
    // Predicated region
    $region30: #{tpu_custom_call.1} parent=1 // pred_check
      _
    $region31: #{tpu_custom_call.1} parent=1 // pred_check_branch
      %55 = sbr.rel (0) target = $region33
    $region32: #{tpu_custom_call.1} parent=1 // pred_region
      _
    $region33: #{tpu_custom_call.1} parent=1 // pred_fallthru
      _
    // Predicated region
    $region34: #{tpu_custom_call.1} parent=1 // pred_check
      _
    $region35: #{tpu_custom_call.1} parent=1 // pred_check_branch
      %57 = sbr.rel (0) target = $region37
    $region36: #{tpu_custom_call.1} parent=1 // pred_region
      _
    $region37: #{tpu_custom_call.1} parent=1 // pred_fallthru
      _
    // Predicated region
    $region38: #{tpu_custom_call.1} parent=1 // pred_check
      _
    $region39: #{tpu_custom_call.1} parent=1 // pred_check_branch
      %59 = sbr.rel (0) target = $region41
    $region40: #{tpu_custom_call.1} parent=1 // pred_region
      _
    $region41: #{tpu_custom_call.1} parent=1 // pred_fallthru
      _
    // Predicated region
    $region42: #{tpu_custom_call.1} parent=1 // pred_check
      _
    $region43: #{tpu_custom_call.1} parent=1 // pred_check_branch
      %61 = sbr.rel (0) target = $region45
    $region44: #{tpu_custom_call.1} parent=1 // pred_region
      _
    $region45: #{tpu_custom_call.1} parent=1 // pred_fallthru
      _
    // Predicated region
    $region46: #{tpu_custom_call.1} parent=1 // pred_check
      _
    $region47: #{tpu_custom_call.1} parent=1 // pred_check_branch
      %63 = sbr.rel (0) target = $region49
    $region48: #{tpu_custom_call.1} parent=1 // pred_region
      _
    $region49: #{tpu_custom_call.1} parent=1 // pred_fallthru
      _
    // Predicated region
    $region50: #{tpu_custom_call.1} parent=1 // pred_check
      _
    $region51: #{tpu_custom_call.1} parent=1 // pred_check_branch
      %65 = sbr.rel (0) target = $region53
    $region52: #{tpu_custom_call.1} parent=1 // pred_region
      %66 = dma.done [#allocation4], 7168
    $region53: #{tpu_custom_call.1} parent=1 // pred_fallthru
      _
    // Predicated region
    $region54: #{tpu_custom_call.1} parent=1 // pred_check
      _
    $region55: #{tpu_custom_call.1} parent=1 // pred_check_branch
      %68 = sbr.rel (0) target = $region57
    $region56: #{tpu_custom_call.1} parent=1 // pred_region
      %69 = dma.done [#allocation7], 7168
    $region57: #{tpu_custom_call.1} parent=1 // pred_fallthru
      _
    %v71 = vld [vmem:[%s0] sm:$0xf]
    %v72 = vld [vmem:[%s0 + $0x8] sm:$0xf]
    %v73 = vld [vmem:[#allocation3] sm:$0xf]
    %v74 = vld [vmem:[#allocation3 + $0x4] sm:$0xf]
    %v75 = vld [vmem:[#allocation3 + $0x8] sm:$0xf]
    %v76 = vld [vmem:[#allocation3 + $0xc] sm:$0xf]
    %v77 = vld [vmem:[#allocation3 + $0x10] sm:$0xf]
    %v78 = vld [vmem:[#allocation3 + $0x14] sm:$0xf]
    %v79 = vld [vmem:[#allocation3 + $0x18] sm:$0xf]
    %v80 = vld [vmem:[#allocation3 + $0x1c] sm:$0xf]
    %v81 = vld [vmem:[#allocation3 + $0x20] sm:$0xf]
    %v82 = vld [vmem:[#allocation3 + $0x24] sm:$0xf]
    %v83 = vld [vmem:[#allocation3 + $0x28] sm:$0xf]
    %v84 = vld [vmem:[#allocation3 + $0x2c] sm:$0xf]
    %v85 = vld [vmem:[#allocation3 + $0x30] sm:$0xf]
    %v86 = vld [vmem:[#allocation3 + $0x34] sm:$0xf]
    %v87 = vld [vmem:[#allocation3 + $0x38] sm:$0xf]
    %v88 = vld [vmem:[#allocation3 + $0x3c] sm:$0xf]
    %v89 = vld [vmem:[%s1] sm:$0xf]
    %v90 = vld [vmem:[%s1 + $0x8] sm:$0xf]
    %v91 = vld [vmem:[#allocation3 + $0x40] sm:$0xf]
    %v92 = vld [vmem:[#allocation3 + $0x44] sm:$0xf]
    %v93 = vld [vmem:[#allocation3 + $0x48] sm:$0xf]
    %v94 = vld [vmem:[#allocation3 + $0x4c] sm:$0xf]
    %v95 = vld [vmem:[#allocation3 + $0x50] sm:$0xf]
    %v96 = vld [vmem:[#allocation3 + $0x54] sm:$0xf]
    %v97 = vld [vmem:[#allocation3 + $0x58] sm:$0xf]
    %v98 = vld [vmem:[#allocation3 + $0x5c] sm:$0xf]
    %v99 = vld [vmem:[#allocation3 + $0x60] sm:$0xf]
    %v100 = vld [vmem:[#allocation3 + $0x64] sm:$0xf]
    %v101 = vld [vmem:[#allocation3 + $0x68] sm:$0xf]
    %v102 = vld [vmem:[#allocation3 + $0x6c] sm:$0xf]
    %v103 = vld [vmem:[#allocation3 + $0x70] sm:$0xf]
    %v104 = vld [vmem:[#allocation3 + $0x74] sm:$0xf]
    %v105 = vld [vmem:[#allocation3 + $0x78] sm:$0xf]
    %v106 = vld [vmem:[#allocation3 + $0x7c] sm:$0xf]
    %v109 = vunpack.c.l.b16 %v89
    %v110 = vunpack.c.l.b16 %v90
    %v111 = vpack.c.b16 %v110, %v109
    %v129 = vunpack.c.l.b16 %v91
    %v130 = vunpack.c.l.b16 %v92
    %v131 = vunpack.c.l.b16 %v93
    %v132 = vunpack.c.l.b16 %v94
    %v133 = vunpack.c.l.b16 %v95
    %v134 = vunpack.c.l.b16 %v96
    %v135 = vunpack.c.l.b16 %v97
    %v136 = vunpack.c.l.b16 %v98
    %v137 = vunpack.c.l.b16 %v99
    %v138 = vunpack.c.l.b16 %v100
    %v139 = vunpack.c.l.b16 %v101
    %v140 = vunpack.c.l.b16 %v102
    %v141 = vunpack.c.l.b16 %v103
    %v142 = vunpack.c.l.b16 %v104
    %v143 = vunpack.c.l.b16 %v105
    %v144 = vunpack.c.l.b16 %v106
    %v145 = vpack.c.b16 %v130, %v129
    %v146 = vpack.c.b16 %v132, %v131
    %v147 = vpack.c.b16 %v134, %v133
    %v148 = vpack.c.b16 %v136, %v135
    %v149 = vpack.c.b16 %v138, %v137
    %v150 = vpack.c.b16 %v140, %v139
    %v151 = vpack.c.b16 %v142, %v141
    %v152 = vpack.c.b16 %v144, %v143
    %161 = vmatprep.subr.bf16.mxu0 0
    %162 = vmatpush1.bf16.msra.mxu0 %v145
    %163 = vmatprep.subr.bf16.mxu0 0
    %164 = vmatpush1.bf16.msra.mxu0 %v146
    %165 = vmatprep.subr.bf16.mxu0 0
    %166 = vmatpush1.bf16.msra.mxu0 %v147
    %167 = vmatprep.subr.bf16.mxu0 0
    %168 = vmatpush1.bf16.msra.mxu0 %v148
    %169 = vmatprep.subr.bf16.mxu0 0
    %170 = vmatpush1.bf16.msra.mxu0 %v149
    %171 = vmatprep.subr.bf16.mxu0 0
    %172 = vmatpush1.bf16.msra.mxu0 %v150
    %173 = vmatprep.subr.bf16.mxu0 0
    %174 = vmatpush1.bf16.msra.mxu0 %v151
    %175 = vmatprep.subr.bf16.mxu0 0
    %176 = vmatpush1.bf16.msra.mxu0 %v152
    %177 = vmatprep.subr.bf16.mxu0 0
    %178 = vmatpush1.bf16.msra.mxu0 0
    %179 = vmatprep.subr.bf16.mxu0 0
    %180 = vmatpush1.bf16.msra.mxu0 0
    %181 = vmatprep.subr.bf16.mxu0 0
    %182 = vmatpush1.bf16.msra.mxu0 0
    %183 = vmatprep.subr.bf16.mxu0 0
    %184 = vmatpush1.bf16.msra.mxu0 0
    %185 = vmatprep.subr.bf16.mxu0 0
    %186 = vmatpush1.bf16.msra.mxu0 0
    %187 = vmatprep.subr.bf16.mxu0 0
    %188 = vmatpush1.bf16.msra.mxu0 0
    %189 = vmatprep.subr.bf16.mxu0 0
    %190 = vmatpush1.bf16.msra.mxu0 0
    %191 = vmatprep.subr.bf16.mxu0 0
    %192 = vmatpush1.bf16.msra.mxu0 0
    %193 = vmatprep.mubr.bf16.mxu0 0
    %194 = vmatmul.mubr.bf16.gmra.mrb[0].mxu0 %v111
    %v195 = vpop.f32.mrb[0].mxu0
    %v196 = vadd.f32 0.0, %v195
    %v197 = vpop.f32.mrb[0].mxu0
    %v198 = vpop.f32.mrb[0].mxu0
    %v199 = vadd.f32 0.0, %v198
    %v200 = vpop.f32.mrb[0].mxu0
    %201 = vdwg.mxu0
    %v204 = vunpack.c.l.b16 %v71
    %v205 = vunpack.c.l.b16 %v72
    %v206 = vpack.c.b16 %v205, %v204
    %v224 = vunpack.c.l.b16 %v73
    %v225 = vunpack.c.l.b16 %v74
    %v226 = vunpack.c.l.b16 %v75
    %v227 = vunpack.c.l.b16 %v76
    %v228 = vunpack.c.l.b16 %v77
    %v229 = vunpack.c.l.b16 %v78
    %v230 = vunpack.c.l.b16 %v79
    %v231 = vunpack.c.l.b16 %v80
    %v232 = vunpack.c.l.b16 %v81
    %v233 = vunpack.c.l.b16 %v82
    %v234 = vunpack.c.l.b16 %v83
    %v235 = vunpack.c.l.b16 %v84
    %v236 = vunpack.c.l.b16 %v85
    %v237 = vunpack.c.l.b16 %v86
    %v238 = vunpack.c.l.b16 %v87
    %v239 = vunpack.c.l.b16 %v88
    %v240 = vpack.c.b16 %v225, %v224
    %v241 = vpack.c.b16 %v227, %v226
    %v242 = vpack.c.b16 %v229, %v228
    %v243 = vpack.c.b16 %v231, %v230
    %v244 = vpack.c.b16 %v233, %v232
    %v245 = vpack.c.b16 %v235, %v234
    %v246 = vpack.c.b16 %v237, %v236
    %v247 = vpack.c.b16 %v239, %v238
    %256 = vmatprep.subr.bf16.mxu0 0
    %257 = vmatpush1.bf16.msra.mxu0 %v240
    %258 = vmatprep.subr.bf16.mxu0 0
    %259 = vmatpush1.bf16.msra.mxu0 %v241
    %260 = vmatprep.subr.bf16.mxu0 0
    %261 = vmatpush1.bf16.msra.mxu0 %v242
    %262 = vmatprep.subr.bf16.mxu0 0
    %263 = vmatpush1.bf16.msra.mxu0 %v243
    %264 = vmatprep.subr.bf16.mxu0 0
    %265 = vmatpush1.bf16.msra.mxu0 %v244
    %266 = vmatprep.subr.bf16.mxu0 0
    %267 = vmatpush1.bf16.msra.mxu0 %v245
    %268 = vmatprep.subr.bf16.mxu0 0
    %269 = vmatpush1.bf16.msra.mxu0 %v246
    %270 = vmatprep.subr.bf16.mxu0 0
    %271 = vmatpush1.bf16.msra.mxu0 %v247
    %272 = vmatprep.subr.bf16.mxu0 0
    %273 = vmatpush1.bf16.msra.mxu0 0
    %274 = vmatprep.subr.bf16.mxu0 0
    %275 = vmatpush1.bf16.msra.mxu0 0
    %276 = vmatprep.subr.bf16.mxu0 0
    %277 = vmatpush1.bf16.msra.mxu0 0
    %278 = vmatprep.subr.bf16.mxu0 0
    %279 = vmatpush1.bf16.msra.mxu0 0
    %280 = vmatprep.subr.bf16.mxu0 0
    %281 = vmatpush1.bf16.msra.mxu0 0
    %282 = vmatprep.subr.bf16.mxu0 0
    %283 = vmatpush1.bf16.msra.mxu0 0
    %284 = vmatprep.subr.bf16.mxu0 0
    %285 = vmatpush1.bf16.msra.mxu0 0
    %286 = vmatprep.subr.bf16.mxu0 0
    %287 = vmatpush1.bf16.msra.mxu0 0
    %288 = vmatprep.mubr.bf16.mxu0 0
    %289 = vmatmul.mubr.bf16.gmra.mrb[0].mxu0 %v206
    %v290 = vpop.f32.mrb[0].mxu0
    %v291 = vadd.f32 %v196, %v290
    %v292 = vpop.f32.mrb[0].mxu0
    %v293 = vpop.f32.mrb[0].mxu0
    %v294 = vadd.f32 %v199, %v293
    %v295 = vpop.f32.mrb[0].mxu0
    %296 = vdwg.mxu0
    %v297 = vld [vmem:[%s0] sm:$0xf]
    %v298 = vld [vmem:[%s0 + $0x4] sm:$0x1]
    %v299 = vld [vmem:[%s0 + $0x8] sm:$0xf]
    %v300 = vld [vmem:[%s0 + $0xc] sm:$0x1]
    %vm301 = vsmask.f32 3328
    %vm302 = vsmask.f32 7440
    %vm303 = vmor %vm301, %vm302
    %v305 = vshrl.u32 %v297, 16
    %v307 = vrot.slane %v305, 4
    %v308 = vshll.u32 %v297, 16
    %v310 = vrot.slane %v308, 5
    %v311 = vor.u32 %v307, %v310
    %v312 = vrot.slane %v311, 4
    %v314 = vshll.u32 %v298, 16
    %v316 = vrot.slane %v314, 5
    %v317 = vsel %vm303, %v312, %v316
    %v319 = vshrl.u32 %v299, 16
    %v321 = vrot.slane %v319, 4
    %v322 = vshll.u32 %v299, 16
    %v324 = vrot.slane %v322, 5
    %v325 = vor.u32 %v321, %v324
    %v326 = vrot.slane %v325, 4
    %v328 = vshll.u32 %v300, 16
    %v330 = vrot.slane %v328, 5
    %v331 = vsel %vm303, %v326, %v330
    %v332 = vld [vmem:[#allocation3 + $0x80] sm:$0xf]
    %v333 = vld [vmem:[#allocation3 + $0x84] sm:$0xf]
    %v334 = vld [vmem:[#allocation3 + $0x88] sm:$0xf]
    %v335 = vld [vmem:[#allocation3 + $0x8c] sm:$0xf]
    %v336 = vld [vmem:[#allocation3 + $0x90] sm:$0xf]
    %v337 = vld [vmem:[#allocation3 + $0x94] sm:$0xf]
    %v338 = vld [vmem:[#allocation3 + $0x98] sm:$0xf]
    %v339 = vld [vmem:[#allocation3 + $0x9c] sm:$0xf]
    %v340 = vld [vmem:[#allocation3 + $0xa0] sm:$0xf]
    %v341 = vld [vmem:[#allocation3 + $0xa4] sm:$0xf]
    %v342 = vld [vmem:[#allocation3 + $0xa8] sm:$0xf]
    %v343 = vld [vmem:[#allocation3 + $0xac] sm:$0xf]
    %v344 = vld [vmem:[#allocation3 + $0xb0] sm:$0xf]
    %v345 = vld [vmem:[#allocation3 + $0xb4] sm:$0xf]
    %v346 = vld [vmem:[#allocation3 + $0xb8] sm:$0xf]
    %v347 = vld [vmem:[#allocation3 + $0xbc] sm:$0xf]
    %v348 = vunpack.c.l.b16 %v317
    %v349 = vunpack.c.l.b16 %v331
    %v350 = vpack.c.b16 %v349, %v348
    %v368 = vunpack.c.l.b16 %v332
    %v369 = vunpack.c.l.b16 %v333
    %v370 = vunpack.c.l.b16 %v334
    %v371 = vunpack.c.l.b16 %v335
    %v372 = vunpack.c.l.b16 %v336
    %v373 = vunpack.c.l.b16 %v337
    %v374 = vunpack.c.l.b16 %v338
    %v375 = vunpack.c.l.b16 %v339
    %v376 = vunpack.c.l.b16 %v340
    %v377 = vunpack.c.l.b16 %v341
    %v378 = vunpack.c.l.b16 %v342
    %v379 = vunpack.c.l.b16 %v343
    %v380 = vunpack.c.l.b16 %v344
    %v381 = vunpack.c.l.b16 %v345
    %v382 = vunpack.c.l.b16 %v346
    %v383 = vunpack.c.l.b16 %v347
    %v384 = vpack.c.b16 %v369, %v368
    %v385 = vpack.c.b16 %v371, %v370
    %v386 = vpack.c.b16 %v373, %v372
    %v387 = vpack.c.b16 %v375, %v374
    %v388 = vpack.c.b16 %v377, %v376
    %v389 = vpack.c.b16 %v379, %v378
    %v390 = vpack.c.b16 %v381, %v380
    %v391 = vpack.c.b16 %v383, %v382
    %400 = vmatprep.subr.bf16.mxu0 0
    %401 = vmatpush1.bf16.msra.mxu0 %v384
    %402 = vmatprep.subr.bf16.mxu0 0
    %403 = vmatpush1.bf16.msra.mxu0 %v385
    %404 = vmatprep.subr.bf16.mxu0 0
    %405 = vmatpush1.bf16.msra.mxu0 %v386
    %406 = vmatprep.subr.bf16.mxu0 0
    %407 = vmatpush1.bf16.msra.mxu0 %v387
    %408 = vmatprep.subr.bf16.mxu0 0
    %409 = vmatpush1.bf16.msra.mxu0 %v388
    %410 = vmatprep.subr.bf16.mxu0 0
    %411 = vmatpush1.bf16.msra.mxu0 %v389
    %412 = vmatprep.subr.bf16.mxu0 0
    %413 = vmatpush1.bf16.msra.mxu0 %v390
    %414 = vmatprep.subr.bf16.mxu0 0
    %415 = vmatpush1.bf16.msra.mxu0 %v391
    %416 = vmatprep.subr.bf16.mxu0 0
    %417 = vmatpush1.bf16.msra.mxu0 0
    %418 = vmatprep.subr.bf16.mxu0 0
    %419 = vmatpush1.bf16.msra.mxu0 0
    %420 = vmatprep.subr.bf16.mxu0 0
    %421 = vmatpush1.bf16.msra.mxu0 0
    %422 = vmatprep.subr.bf16.mxu0 0
    %423 = vmatpush1.bf16.msra.mxu0 0
    %424 = vmatprep.subr.bf16.mxu0 0
    %425 = vmatpush1.bf16.msra.mxu0 0
    %426 = vmatprep.subr.bf16.mxu0 0
    %427 = vmatpush1.bf16.msra.mxu0 0
    %428 = vmatprep.subr.bf16.mxu0 0
    %429 = vmatpush1.bf16.msra.mxu0 0
    %430 = vmatprep.subr.bf16.mxu0 0
    %431 = vmatpush1.bf16.msra.mxu0 0
    %432 = vmatprep.mubr.bf16.mxu0 0
    %433 = vmatmul.mubr.bf16.gmra.mrb[0].mxu0 %v350
    %v434 = vpop.f32.mrb[0].mxu0
    %v435 = vadd.f32 0.0, %v434
    %v436 = vpop.f32.mrb[0].mxu0
    %v437 = vpop.f32.mrb[0].mxu0
    %v438 = vadd.f32 0.0, %v437
    %v439 = vpop.f32.mrb[0].mxu0
    %440 = vdwg.mxu0
    %v441 = vadd.f32 %v291, %v435
    %v442 = vadd.f32 %v294, %v438
    %v443 = vld [vmem:[%s1] sm:$0xf]
    %v444 = vld [vmem:[%s1 + $0x4] sm:$0x1]
    %v445 = vld [vmem:[%s1 + $0x8] sm:$0xf]
    %v446 = vld [vmem:[%s1 + $0xc] sm:$0x1]
    %v448 = vshrl.u32 %v443, 16
    %v450 = vrot.slane %v448, 4
    %v451 = vshll.u32 %v443, 16
    %v453 = vrot.slane %v451, 5
    %v454 = vor.u32 %v450, %v453
    %v455 = vrot.slane %v454, 4
    %v457 = vshll.u32 %v444, 16
    %v459 = vrot.slane %v457, 5
    %v460 = vsel %vm303, %v455, %v459
    %v462 = vshrl.u32 %v445, 16
    %v464 = vrot.slane %v462, 4
    %v465 = vshll.u32 %v445, 16
    %v467 = vrot.slane %v465, 5
    %v468 = vor.u32 %v464, %v467
    %v469 = vrot.slane %v468, 4
    %v471 = vshll.u32 %v446, 16
    %v473 = vrot.slane %v471, 5
    %v474 = vsel %vm303, %v469, %v473
    %v475 = vld [vmem:[#allocation3 + $0xc0] sm:$0xf]
    %v476 = vld [vmem:[#allocation3 + $0xc4] sm:$0xf]
    %v477 = vld [vmem:[#allocation3 + $0xc8] sm:$0xf]
    %v478 = vld [vmem:[#allocation3 + $0xcc] sm:$0xf]
    %v479 = vld [vmem:[#allocation3 + $0xd0] sm:$0xf]
    %v480 = vld [vmem:[#allocation3 + $0xd4] sm:$0xf]
    %v481 = vld [vmem:[#allocation3 + $0xd8] sm:$0xf]
    %v482 = vld [vmem:[#allocation3 + $0xdc] sm:$0xf]
    %v483 = vld [vmem:[#allocation3 + $0xe0] sm:$0xf]
    %v484 = vld [vmem:[#allocation3 + $0xe4] sm:$0xf]
    %v485 = vld [vmem:[#allocation3 + $0xe8] sm:$0xf]
    %v486 = vld [vmem:[#allocation3 + $0xec] sm:$0xf]
    %v487 = vld [vmem:[#allocation3 + $0xf0] sm:$0xf]
    %v488 = vld [vmem:[#allocation3 + $0xf4] sm:$0xf]
    %v489 = vld [vmem:[#allocation3 + $0xf8] sm:$0xf]
    %v490 = vld [vmem:[#allocation3 + $0xfc] sm:$0xf]
    %v491 = vunpack.c.l.b16 %v460
    %v492 = vunpack.c.l.b16 %v474
    %v493 = vpack.c.b16 %v492, %v491
    %v511 = vunpack.c.l.b16 %v475
    %v512 = vunpack.c.l.b16 %v476
    %v513 = vunpack.c.l.b16 %v477
    %v514 = vunpack.c.l.b16 %v478
    %v515 = vunpack.c.l.b16 %v479
    %v516 = vunpack.c.l.b16 %v480
    %v517 = vunpack.c.l.b16 %v481
    %v518 = vunpack.c.l.b16 %v482
    %v519 = vunpack.c.l.b16 %v483
    %v520 = vunpack.c.l.b16 %v484
    %v521 = vunpack.c.l.b16 %v485
    %v522 = vunpack.c.l.b16 %v486
    %v523 = vunpack.c.l.b16 %v487
    %v524 = vunpack.c.l.b16 %v488
    %v525 = vunpack.c.l.b16 %v489
    %v526 = vunpack.c.l.b16 %v490
    %v527 = vpack.c.b16 %v512, %v511
    %v528 = vpack.c.b16 %v514, %v513
    %v529 = vpack.c.b16 %v516, %v515
    %v530 = vpack.c.b16 %v518, %v517
    %v531 = vpack.c.b16 %v520, %v519
    %v532 = vpack.c.b16 %v522, %v521
    %v533 = vpack.c.b16 %v524, %v523
    %v534 = vpack.c.b16 %v526, %v525
    %543 = vmatprep.subr.bf16.mxu0 0
    %544 = vmatpush1.bf16.msra.mxu0 %v527
    %545 = vmatprep.subr.bf16.mxu0 0
    %546 = vmatpush1.bf16.msra.mxu0 %v528
    %547 = vmatprep.subr.bf16.mxu0 0
    %548 = vmatpush1.bf16.msra.mxu0 %v529
    %549 = vmatprep.subr.bf16.mxu0 0
    %550 = vmatpush1.bf16.msra.mxu0 %v530
    %551 = vmatprep.subr.bf16.mxu0 0
    %552 = vmatpush1.bf16.msra.mxu0 %v531
    %553 = vmatprep.subr.bf16.mxu0 0
    %554 = vmatpush1.bf16.msra.mxu0 %v532
    %555 = vmatprep.subr.bf16.mxu0 0
    %556 = vmatpush1.bf16.msra.mxu0 %v533
    %557 = vmatprep.subr.bf16.mxu0 0
    %558 = vmatpush1.bf16.msra.mxu0 %v534
    %559 = vmatprep.subr.bf16.mxu0 0
    %560 = vmatpush1.bf16.msra.mxu0 0
    %561 = vmatprep.subr.bf16.mxu0 0
    %562 = vmatpush1.bf16.msra.mxu0 0
    %563 = vmatprep.subr.bf16.mxu0 0
    %564 = vmatpush1.bf16.msra.mxu0 0
    %565 = vmatprep.subr.bf16.mxu0 0
    %566 = vmatpush1.bf16.msra.mxu0 0
    %567 = vmatprep.subr.bf16.mxu0 0
    %568 = vmatpush1.bf16.msra.mxu0 0
    %569 = vmatprep.subr.bf16.mxu0 0
    %570 = vmatpush1.bf16.msra.mxu0 0
    %571 = vmatprep.subr.bf16.mxu0 0
    %572 = vmatpush1.bf16.msra.mxu0 0
    %573 = vmatprep.subr.bf16.mxu0 0
    %574 = vmatpush1.bf16.msra.mxu0 0
    %575 = vmatprep.mubr.bf16.mxu0 0
    %576 = vmatmul.mubr.bf16.gmra.mrb[0].mxu0 %v493
    %v577 = vpop.f32.mrb[0].mxu0
    %v578 = vadd.f32 0.0, %v577
    %v579 = vpop.f32.mrb[0].mxu0
    %v580 = vpop.f32.mrb[0].mxu0
    %v581 = vadd.f32 0.0, %v580
    %v582 = vpop.f32.mrb[0].mxu0
    %583 = vdwg.mxu0
    %v584 = vadd.f32 %v441, %v578
    %v585 = vadd.f32 %v442, %v581
    %v586 = vld [vmem:[%s0] sm:$0xe]
    %v587 = vld [vmem:[%s0 + $0x8] sm:$0xe]
    %vm592 = vcmask 1042432
    %vm593 = vcmask 1046532
    %vm594 = vmor %vm592, %vm593
    %v595 = vrot.slane %v586, 5
    %v596 = vrot.slane %v595, 4
    %v597 = vrot.slane %v298, 5
    %v598 = vsel %vm594, %v596, %v597
    %v599 = vrot.slane %v587, 5
    %v600 = vrot.slane %v599, 4
    %v601 = vrot.slane %v300, 5
    %v602 = vsel %vm594, %v600, %v601
    %v603 = vld [vmem:[#allocation3 + $0x100] sm:$0xf]
    %v604 = vld [vmem:[#allocation3 + $0x104] sm:$0xf]
    %v605 = vld [vmem:[#allocation3 + $0x108] sm:$0xf]
    %v606 = vld [vmem:[#allocation3 + $0x10c] sm:$0xf]
    %v607 = vld [vmem:[#allocation3 + $0x110] sm:$0xf]
    %v608 = vld [vmem:[#allocation3 + $0x114] sm:$0xf]
    %v609 = vld [vmem:[#allocation3 + $0x118] sm:$0xf]
    %v610 = vld [vmem:[#allocation3 + $0x11c] sm:$0xf]
    %v611 = vld [vmem:[#allocation3 + $0x120] sm:$0xf]
    %v612 = vld [vmem:[#allocation3 + $0x124] sm:$0xf]
    %v613 = vld [vmem:[#allocation3 + $0x128] sm:$0xf]
    %v614 = vld [vmem:[#allocation3 + $0x12c] sm:$0xf]
    %v615 = vld [vmem:[#allocation3 + $0x130] sm:$0xf]
    %v616 = vld [vmem:[#allocation3 + $0x134] sm:$0xf]
    %v617 = vld [vmem:[#allocation3 + $0x138] sm:$0xf]
    %v618 = vld [vmem:[#allocation3 + $0x13c] sm:$0xf]
    %v619 = vunpack.c.l.b16 %v598
    %v620 = vunpack.c.l.b16 %v602
    %v621 = vpack.c.b16 %v620, %v619
    %v639 = vunpack.c.l.b16 %v603
    %v640 = vunpack.c.l.b16 %v604
    %v641 = vunpack.c.l.b16 %v605
    %v642 = vunpack.c.l.b16 %v606
    %v643 = vunpack.c.l.b16 %v607
    %v644 = vunpack.c.l.b16 %v608
    %v645 = vunpack.c.l.b16 %v609
    %v646 = vunpack.c.l.b16 %v610
    %v647 = vunpack.c.l.b16 %v611
    %v648 = vunpack.c.l.b16 %v612
    %v649 = vunpack.c.l.b16 %v613
    %v650 = vunpack.c.l.b16 %v614
    %v651 = vunpack.c.l.b16 %v615
    %v652 = vunpack.c.l.b16 %v616
    %v653 = vunpack.c.l.b16 %v617
    %v654 = vunpack.c.l.b16 %v618
    %v655 = vpack.c.b16 %v640, %v639
    %v656 = vpack.c.b16 %v642, %v641
    %v657 = vpack.c.b16 %v644, %v643
    %v658 = vpack.c.b16 %v646, %v645
    %v659 = vpack.c.b16 %v648, %v647
    %v660 = vpack.c.b16 %v650, %v649
    %v661 = vpack.c.b16 %v652, %v651
    %v662 = vpack.c.b16 %v654, %v653
    %671 = vmatprep.subr.bf16.mxu0 0
    %672 = vmatpush1.bf16.msra.mxu0 %v655
    %673 = vmatprep.subr.bf16.mxu0 0
    %674 = vmatpush1.bf16.msra.mxu0 %v656
    %675 = vmatprep.subr.bf16.mxu0 0
    %676 = vmatpush1.bf16.msra.mxu0 %v657
    %677 = vmatprep.subr.bf16.mxu0 0
    %678 = vmatpush1.bf16.msra.mxu0 %v658
    %679 = vmatprep.subr.bf16.mxu0 0
    %680 = vmatpush1.bf16.msra.mxu0 %v659
    %681 = vmatprep.subr.bf16.mxu0 0
    %682 = vmatpush1.bf16.msra.mxu0 %v660
    %683 = vmatprep.subr.bf16.mxu0 0
    %684 = vmatpush1.bf16.msra.mxu0 %v661
    %685 = vmatprep.subr.bf16.mxu0 0
    %686 = vmatpush1.bf16.msra.mxu0 %v662
    %687 = vmatprep.subr.bf16.mxu0 0
    %688 = vmatpush1.bf16.msra.mxu0 0
    %689 = vmatprep.subr.bf16.mxu0 0
    %690 = vmatpush1.bf16.msra.mxu0 0
    %691 = vmatprep.subr.bf16.mxu0 0
    %692 = vmatpush1.bf16.msra.mxu0 0
    %693 = vmatprep.subr.bf16.mxu0 0
    %694 = vmatpush1.bf16.msra.mxu0 0
    %695 = vmatprep.subr.bf16.mxu0 0
    %696 = vmatpush1.bf16.msra.mxu0 0
    %697 = vmatprep.subr.bf16.mxu0 0
    %698 = vmatpush1.bf16.msra.mxu0 0
    %699 = vmatprep.subr.bf16.mxu0 0
    %700 = vmatpush1.bf16.msra.mxu0 0
    %701 = vmatprep.subr.bf16.mxu0 0
    %702 = vmatpush1.bf16.msra.mxu0 0
    %703 = vmatprep.mubr.bf16.mxu0 0
    %704 = vmatmul.mubr.bf16.gmra.mrb[0].mxu0 %v621
    %v705 = vpop.f32.mrb[0].mxu0
    %v706 = vadd.f32 0.0, %v705
    %v707 = vpop.f32.mrb[0].mxu0
    %v708 = vpop.f32.mrb[0].mxu0
    %v709 = vadd.f32 0.0, %v708
    %v710 = vpop.f32.mrb[0].mxu0
    %711 = vdwg.mxu0
    %v712 = vadd.f32 %v584, %v706
    %v713 = vadd.f32 %v585, %v709
    %v714 = vld [vmem:[%s1] sm:$0xe]
    %v715 = vld [vmem:[%s1 + $0x8] sm:$0xe]
    %v720 = vrot.slane %v714, 5
    %v721 = vrot.slane %v720, 4
    %v722 = vrot.slane %v444, 5
    %v723 = vsel %vm594, %v721, %v722
    %v724 = vrot.slane %v715, 5
    %v725 = vrot.slane %v724, 4
    %v726 = vrot.slane %v446, 5
    %v727 = vsel %vm594, %v725, %v726
    %v728 = vld [vmem:[#allocation3 + $0x140] sm:$0xf]
    %v729 = vld [vmem:[#allocation3 + $0x144] sm:$0xf]
    %v730 = vld [vmem:[#allocation3 + $0x148] sm:$0xf]
    %v731 = vld [vmem:[#allocation3 + $0x14c] sm:$0xf]
    %v732 = vld [vmem:[#allocation3 + $0x150] sm:$0xf]
    %v733 = vld [vmem:[#allocation3 + $0x154] sm:$0xf]
    %v734 = vld [vmem:[#allocation3 + $0x158] sm:$0xf]
    %v735 = vld [vmem:[#allocation3 + $0x15c] sm:$0xf]
    %v736 = vld [vmem:[#allocation3 + $0x160] sm:$0xf]
    %v737 = vld [vmem:[#allocation3 + $0x164] sm:$0xf]
    %v738 = vld [vmem:[#allocation3 + $0x168] sm:$0xf]
    %v739 = vld [vmem:[#allocation3 + $0x16c] sm:$0xf]
    %v740 = vld [vmem:[#allocation3 + $0x170] sm:$0xf]
    %v741 = vld [vmem:[#allocation3 + $0x174] sm:$0xf]
    %v742 = vld [vmem:[#allocation3 + $0x178] sm:$0xf]
    %v743 = vld [vmem:[#allocation3 + $0x17c] sm:$0xf]
    %v744 = vunpack.c.l.b16 %v723
    %v745 = vunpack.c.l.b16 %v727
    %v746 = vpack.c.b16 %v745, %v744
    %v764 = vunpack.c.l.b16 %v728
    %v765 = vunpack.c.l.b16 %v729
    %v766 = vunpack.c.l.b16 %v730
    %v767 = vunpack.c.l.b16 %v731
    %v768 = vunpack.c.l.b16 %v732
    %v769 = vunpack.c.l.b16 %v733
    %v770 = vunpack.c.l.b16 %v734
    %v771 = vunpack.c.l.b16 %v735
    %v772 = vunpack.c.l.b16 %v736
    %v773 = vunpack.c.l.b16 %v737
    %v774 = vunpack.c.l.b16 %v738
    %v775 = vunpack.c.l.b16 %v739
    %v776 = vunpack.c.l.b16 %v740
    %v777 = vunpack.c.l.b16 %v741
    %v778 = vunpack.c.l.b16 %v742
    %v779 = vunpack.c.l.b16 %v743
    %v780 = vpack.c.b16 %v765, %v764
    %v781 = vpack.c.b16 %v767, %v766
    %v782 = vpack.c.b16 %v769, %v768
    %v783 = vpack.c.b16 %v771, %v770
    %v784 = vpack.c.b16 %v773, %v772
    %v785 = vpack.c.b16 %v775, %v774
    %v786 = vpack.c.b16 %v777, %v776
    %v787 = vpack.c.b16 %v779, %v778
    %796 = vmatprep.subr.bf16.mxu0 0
    %797 = vmatpush1.bf16.msra.mxu0 %v780
    %798 = vmatprep.subr.bf16.mxu0 0
    %799 = vmatpush1.bf16.msra.mxu0 %v781
    %800 = vmatprep.subr.bf16.mxu0 0
    %801 = vmatpush1.bf16.msra.mxu0 %v782
    %802 = vmatprep.subr.bf16.mxu0 0
    %803 = vmatpush1.bf16.msra.mxu0 %v783
    %804 = vmatprep.subr.bf16.mxu0 0
    %805 = vmatpush1.bf16.msra.mxu0 %v784
    %806 = vmatprep.subr.bf16.mxu0 0
    %807 = vmatpush1.bf16.msra.mxu0 %v785
    %808 = vmatprep.subr.bf16.mxu0 0
    %809 = vmatpush1.bf16.msra.mxu0 %v786
    %810 = vmatprep.subr.bf16.mxu0 0
    %811 = vmatpush1.bf16.msra.mxu0 %v787
    %812 = vmatprep.subr.bf16.mxu0 0
    %813 = vmatpush1.bf16.msra.mxu0 0
    %814 = vmatprep.subr.bf16.mxu0 0
    %815 = vmatpush1.bf16.msra.mxu0 0
    %816 = vmatprep.subr.bf16.mxu0 0
    %817 = vmatpush1.bf16.msra.mxu0 0
    %818 = vmatprep.subr.bf16.mxu0 0
    %819 = vmatpush1.bf16.msra.mxu0 0
    %820 = vmatprep.subr.bf16.mxu0 0
    %821 = vmatpush1.bf16.msra.mxu0 0
    %822 = vmatprep.subr.bf16.mxu0 0
    %823 = vmatpush1.bf16.msra.mxu0 0
    %824 = vmatprep.subr.bf16.mxu0 0
    %825 = vmatpush1.bf16.msra.mxu0 0
    %826 = vmatprep.subr.bf16.mxu0 0
    %827 = vmatpush1.bf16.msra.mxu0 0
    %828 = vmatprep.mubr.bf16.mxu0 0
    %829 = vmatmul.mubr.bf16.gmra.mrb[0].mxu0 %v746
    %v830 = vpop.f32.mrb[0].mxu0
    %v831 = vadd.f32 0.0, %v830
    %v832 = vpop.f32.mrb[0].mxu0
    %v833 = vpop.f32.mrb[0].mxu0
    %v834 = vadd.f32 0.0, %v833
    %v835 = vpop.f32.mrb[0].mxu0
    %836 = vdwg.mxu0
    %v837 = vadd.f32 %v712, %v831
    %v838 = vadd.f32 %v713, %v834
    %v839 = vld [vmem:[%s0 + $0x4] sm:$0x3]
    %v840 = vld [vmem:[%s0 + $0xc] sm:$0x3]
    %vm841 = vsmask.f32 2304
    %vm842 = vsmask.f32 6416
    %vm843 = vmor %vm841, %vm842
    %v845 = vshrl.u32 %v586, 16
    %v847 = vrot.slane %v845, 5
    %v848 = vshll.u32 %v586, 16
    %v850 = vrot.slane %v848, 6
    %v851 = vor.u32 %v847, %v850
    %v852 = vrot.slane %v851, 4
    %v854 = vshrl.u32 %v839, 16
    %v856 = vrot.slane %v854, 5
    %v857 = vshll.u32 %v839, 16
    %v859 = vrot.slane %v857, 6
    %v860 = vor.u32 %v856, %v859
    %v861 = vsel %vm843, %v852, %v860
    %v863 = vshrl.u32 %v587, 16
    %v865 = vrot.slane %v863, 5
    %v866 = vshll.u32 %v587, 16
    %v868 = vrot.slane %v866, 6
    %v869 = vor.u32 %v865, %v868
    %v870 = vrot.slane %v869, 4
    %v872 = vshrl.u32 %v840, 16
    %v874 = vrot.slane %v872, 5
    %v875 = vshll.u32 %v840, 16
    %v877 = vrot.slane %v875, 6
    %v878 = vor.u32 %v874, %v877
    %v879 = vsel %vm843, %v870, %v878
    %v880 = vld [vmem:[#allocation3 + $0x180] sm:$0xf]
    %v881 = vld [vmem:[#allocation3 + $0x184] sm:$0xf]
    %v882 = vld [vmem:[#allocation3 + $0x188] sm:$0xf]
    %v883 = vld [vmem:[#allocation3 + $0x18c] sm:$0xf]
    %v884 = vld [vmem:[#allocation3 + $0x190] sm:$0xf]
    %v885 = vld [vmem:[#allocation3 + $0x194] sm:$0xf]
    %v886 = vld [vmem:[#allocation3 + $0x198] sm:$0xf]
    %v887 = vld [vmem:[#allocation3 + $0x19c] sm:$0xf]
    %v888 = vld [vmem:[#allocation3 + $0x1a0] sm:$0xf]
    %v889 = vld [vmem:[#allocation3 + $0x1a4] sm:$0xf]
    %v890 = vld [vmem:[#allocation3 + $0x1a8] sm:$0xf]
    %v891 = vld [vmem:[#allocation3 + $0x1ac] sm:$0xf]
    %v892 = vld [vmem:[#allocation3 + $0x1b0] sm:$0xf]
    %v893 = vld [vmem:[#allocation3 + $0x1b4] sm:$0xf]
    %v894 = vld [vmem:[#allocation3 + $0x1b8] sm:$0xf]
    %v895 = vld [vmem:[#allocation3 + $0x1bc] sm:$0xf]
    %v896 = vunpack.c.l.b16 %v861
    %v897 = vunpack.c.l.b16 %v879
    %v898 = vpack.c.b16 %v897, %v896
    %v916 = vunpack.c.l.b16 %v880
    %v917 = vunpack.c.l.b16 %v881
    %v918 = vunpack.c.l.b16 %v882
    %v919 = vunpack.c.l.b16 %v883
    %v920 = vunpack.c.l.b16 %v884
    %v921 = vunpack.c.l.b16 %v885
    %v922 = vunpack.c.l.b16 %v886
    %v923 = vunpack.c.l.b16 %v887
    %v924 = vunpack.c.l.b16 %v888
    %v925 = vunpack.c.l.b16 %v889
    %v926 = vunpack.c.l.b16 %v890
    %v927 = vunpack.c.l.b16 %v891
    %v928 = vunpack.c.l.b16 %v892
    %v929 = vunpack.c.l.b16 %v893
    %v930 = vunpack.c.l.b16 %v894
    %v931 = vunpack.c.l.b16 %v895
    %v932 = vpack.c.b16 %v917, %v916
    %v933 = vpack.c.b16 %v919, %v918
    %v934 = vpack.c.b16 %v921, %v920
    %v935 = vpack.c.b16 %v923, %v922
    %v936 = vpack.c.b16 %v925, %v924
    %v937 = vpack.c.b16 %v927, %v926
    %v938 = vpack.c.b16 %v929, %v928
    %v939 = vpack.c.b16 %v931, %v930
    %948 = vmatprep.subr.bf16.mxu0 0
    %949 = vmatpush1.bf16.msra.mxu0 %v932
    %950 = vmatprep.subr.bf16.mxu0 0
    %951 = vmatpush1.bf16.msra.mxu0 %v933
    %952 = vmatprep.subr.bf16.mxu0 0
    %953 = vmatpush1.bf16.msra.mxu0 %v934
    %954 = vmatprep.subr.bf16.mxu0 0
    %955 = vmatpush1.bf16.msra.mxu0 %v935
    %956 = vmatprep.subr.bf16.mxu0 0
    %957 = vmatpush1.bf16.msra.mxu0 %v936
    %958 = vmatprep.subr.bf16.mxu0 0
    %959 = vmatpush1.bf16.msra.mxu0 %v937
    %960 = vmatprep.subr.bf16.mxu0 0
    %961 = vmatpush1.bf16.msra.mxu0 %v938
    %962 = vmatprep.subr.bf16.mxu0 0
    %963 = vmatpush1.bf16.msra.mxu0 %v939
    %964 = vmatprep.subr.bf16.mxu0 0
    %965 = vmatpush1.bf16.msra.mxu0 0
    %966 = vmatprep.subr.bf16.mxu0 0
    %967 = vmatpush1.bf16.msra.mxu0 0
    %968 = vmatprep.subr.bf16.mxu0 0
    %969 = vmatpush1.bf16.msra.mxu0 0
    %970 = vmatprep.subr.bf16.mxu0 0
    %971 = vmatpush1.bf16.msra.mxu0 0
    %972 = vmatprep.subr.bf16.mxu0 0
    %973 = vmatpush1.bf16.msra.mxu0 0
    %974 = vmatprep.subr.bf16.mxu0 0
    %975 = vmatpush1.bf16.msra.mxu0 0
    %976 = vmatprep.subr.bf16.mxu0 0
    %977 = vmatpush1.bf16.msra.mxu0 0
    %978 = vmatprep.subr.bf16.mxu0 0
    %979 = vmatpush1.bf16.msra.mxu0 0
    %980 = vmatprep.mubr.bf16.mxu0 0
    %981 = vmatmul.mubr.bf16.gmra.mrb[0].mxu0 %v898
    %v982 = vpop.f32.mrb[0].mxu0
    %v983 = vadd.f32 0.0, %v982
    %v984 = vpop.f32.mrb[0].mxu0
    %v985 = vpop.f32.mrb[0].mxu0
    %v986 = vadd.f32 0.0, %v985
    %v987 = vpop.f32.mrb[0].mxu0
    %988 = vdwg.mxu0
    %v989 = vadd.f32 %v837, %v983
    %v990 = vadd.f32 %v838, %v986
    %v991 = vld [vmem:[%s3] sm:$0x1]
    %v993 = vlaneseq
    %v994 = vshrl.u32 %v993, 7
    %v995 = vsub.s32 0, %v994
    %v996 = vrot.slane %v991, %v995
    %v998 = vadd.f32 %v989, %v996
    %v999 = vadd.f32 %v990, %v996
    %v1000 = vmax.f32 %v998, 0.0
    %v1001 = vmax.f32 %v999, 0.0
    %v1002 = vadd.f32 %v1000, %v1001
    %v1003 = vrot.slane %v1002, 4
    %v1004 = vadd.f32 %v1002, %v1003
    %v1005 = vrot.slane %v1004, 2
    %v1006 = vadd.f32 %v1004, %v1005
    %v1007 = vrot.slane %v1006, 1
    %v1008 = vadd.f32 %v1006, %v1007
    %v1009 = vmul.f32 %v1008, 0.0625
    %v1010 = vmul.f32 %v1000, %v1000
    %v1011 = vmul.f32 %v1001, %v1001
    %v1012 = vadd.f32 %v1010, %v1011
    %v1013 = vrot.slane %v1012, 4
    %v1014 = vadd.f32 %v1012, %v1013
    %v1015 = vrot.slane %v1014, 2
    %v1016 = vadd.f32 %v1014, %v1015
    %v1017 = vrot.slane %v1016, 1
    %v1018 = vadd.f32 %v1016, %v1017
    %v1019 = vmul.f32 %v1018, 0.0625
    %v1020 = vmul.f32 %v1009, %v1009
    %v1021 = vsub.f32 %v1019, %v1020
    %v1022 = vadd.f32 %v1021, 1e-05
    %v1023 = vrsqrt.pop %v1022
    %v1024 = vld [vmem:[%s4] sm:$0x1]
    %v1025 = vmul.f32 %v1023, %v1024
    %v1026 = vld [vmem:[%s5] sm:$0x1]
    %v1027 = vmul.f32 %v1009, %v1025
    %v1028 = vsub.f32 %v1026, %v1027
    %v1029 = vlaneseq
    %v1030 = vshrl.u32 %v1029, 7
    %v1031 = vsub.s32 0, %v1030
    %v1032 = vrot.slane %v1025, %v1031
    %v1033 = vmul.f32 %v1000, %v1032
    %v1034 = vmul.f32 %v1001, %v1032
    %v1036 = vlaneseq
    %v1037 = vshrl.u32 %v1036, 7
    %v1038 = vsub.s32 0, %v1037
    %v1039 = vrot.slane %v1028, %v1038
    %v1041 = vadd.f32 %v1033, %v1039
    %v1042 = vadd.f32 %v1034, %v1039
    %vm1043 = vcmask 1043458
    %vm1044 = vsmask.f32 7946
    %vm1045 = vmand %vm1043, %vm1044
    %v1046 = vld [vmem:[#allocation2] sm:$0xc]
    %v1047 = vsel %vm1045, 0, %v1046
    %1048 = vst [vmem:[#allocation2] sm:$0xc] %v1047
    %v1049 = vld [vmem:[#allocation2 + $0xc] sm:$0xc]
    %v1050 = vsel %vm1045, 0, %v1049
    %1051 = vst [vmem:[#allocation2 + $0xc] sm:$0xc] %v1050
    %vm1052 = vcmask 1041408
    %vm1053 = vsmask.f32 1280
    %vm1054 = vmand %vm1052, %vm1053
    %v1055 = vld [vmem:[#allocation2 + $0x8] sm:$0x3]
    %v1056 = vsel %vm1054, 0, %v1055
    %1057 = vst [vmem:[#allocation2 + $0x8] sm:$0x3] %v1056
    %v1058 = vld [vmem:[#allocation2 + $0x14] sm:$0x3]
    %v1059 = vsel %vm1054, 0, %v1058
    %1060 = vst [vmem:[#allocation2 + $0x14] sm:$0x3] %v1059
    %v1061 = vpack.c.bf16 %v1041, %v1041
    %v1062 = vpack.c.bf16 %v1042, %v1042
    %1063 = vst [vmem:[#allocation2 + $0x4] sm:$0xf] %v1061
    %1064 = vst [vmem:[#allocation2 + $0x10] sm:$0xf] %v1062
    %v1065 = vld [vmem:[#allocation2] sm:$0xc]
    %v1066 = vld [vmem:[#allocation2 + $0x4] sm:$0x7]
    %v1067 = vld [vmem:[#allocation2 + $0xc] sm:$0xc]
    %v1068 = vld [vmem:[#allocation2 + $0x10] sm:$0x7]
    %vm1069 = vsmask.f32 5392
    %vm1070 = vmor %vm1053, %vm1069
    %v1072 = vshrl.u32 %v1065, 16
    %v1074 = vrot.slane %v1072, 6
    %v1075 = vshll.u32 %v1065, 16
    %v1077 = vrot.slane %v1075, 7
    %v1078 = vor.u32 %v1074, %v1077
    %v1079 = vrot.slane %v1078, 4
    %v1081 = vshrl.u32 %v1066, 16
    %v1083 = vrot.slane %v1081, 6
    %v1084 = vshll.u32 %v1066, 16
    %v1086 = vrot.slane %v1084, 7
    %v1087 = vor.u32 %v1083, %v1086
    %v1088 = vsel %vm1070, %v1079, %v1087
    %v1090 = vshrl.u32 %v1067, 16
    %v1092 = vrot.slane %v1090, 6
    %v1093 = vshll.u32 %v1067, 16
    %v1095 = vrot.slane %v1093, 7
    %v1096 = vor.u32 %v1092, %v1095
    %v1097 = vrot.slane %v1096, 4
    %v1099 = vshrl.u32 %v1068, 16
    %v1101 = vrot.slane %v1099, 6
    %v1102 = vshll.u32 %v1068, 16
    %v1104 = vrot.slane %v1102, 7
    %v1105 = vor.u32 %v1101, %v1104
    %v1106 = vsel %vm1070, %v1097, %v1105
    %v1107 = vld [vmem:[#allocation6] sm:$0xf]
    %v1108 = vld [vmem:[#allocation6 + $0x4] sm:$0xf]
    %v1109 = vld [vmem:[#allocation6 + $0x8] sm:$0xf]
    %v1110 = vld [vmem:[#allocation6 + $0xc] sm:$0xf]
    %v1111 = vld [vmem:[#allocation6 + $0x10] sm:$0xf]
    %v1112 = vld [vmem:[#allocation6 + $0x14] sm:$0xf]
    %v1113 = vld [vmem:[#allocation6 + $0x18] sm:$0xf]
    %v1114 = vld [vmem:[#allocation6 + $0x1c] sm:$0xf]
    %v1115 = vld [vmem:[#allocation6 + $0x20] sm:$0xf]
    %v1116 = vld [vmem:[#allocation6 + $0x24] sm:$0xf]
    %v1117 = vld [vmem:[#allocation6 + $0x28] sm:$0xf]
    %v1118 = vld [vmem:[#allocation6 + $0x2c] sm:$0xf]
    %v1119 = vld [vmem:[#allocation6 + $0x30] sm:$0xf]
    %v1120 = vld [vmem:[#allocation6 + $0x34] sm:$0xf]
    %v1121 = vld [vmem:[#allocation6 + $0x38] sm:$0xf]
    %v1122 = vld [vmem:[#allocation6 + $0x3c] sm:$0xf]
    %v1123 = vld [vmem:[#allocation2] sm:$0x8]
    %v1124 = vld [vmem:[#allocation2 + $0xc] sm:$0x8]
    %vm1129 = vcmask 1040384
    %vm1130 = vcmask 1044484
    %vm1131 = vmor %vm1129, %vm1130
    %v1132 = vrot.slane %v1123, 7
    %v1133 = vrot.slane %v1132, 4
    %v1134 = vrot.slane %v1066, 7
    %v1135 = vsel %vm1131, %v1133, %v1134
    %v1136 = vrot.slane %v1124, 7
    %v1137 = vrot.slane %v1136, 4
    %v1138 = vrot.slane %v1068, 7
    %v1139 = vsel %vm1131, %v1137, %v1138
    %v1140 = vld [vmem:[#allocation6 + $0x40] sm:$0xf]
    %v1141 = vld [vmem:[#allocation6 + $0x44] sm:$0xf]
    %v1142 = vld [vmem:[#allocation6 + $0x48] sm:$0xf]
    %v1143 = vld [vmem:[#allocation6 + $0x4c] sm:$0xf]
    %v1144 = vld [vmem:[#allocation6 + $0x50] sm:$0xf]
    %v1145 = vld [vmem:[#allocation6 + $0x54] sm:$0xf]
    %v1146 = vld [vmem:[#allocation6 + $0x58] sm:$0xf]
    %v1147 = vld [vmem:[#allocation6 + $0x5c] sm:$0xf]
    %v1148 = vld [vmem:[#allocation6 + $0x60] sm:$0xf]
    %v1149 = vld [vmem:[#allocation6 + $0x64] sm:$0xf]
    %v1150 = vld [vmem:[#allocation6 + $0x68] sm:$0xf]
    %v1151 = vld [vmem:[#allocation6 + $0x6c] sm:$0xf]
    %v1152 = vld [vmem:[#allocation6 + $0x70] sm:$0xf]
    %v1153 = vld [vmem:[#allocation6 + $0x74] sm:$0xf]
    %v1154 = vld [vmem:[#allocation6 + $0x78] sm:$0xf]
    %v1155 = vld [vmem:[#allocation6 + $0x7c] sm:$0xf]
    %v1156 = vunpack.c.l.b16 %v1135
    %v1157 = vunpack.c.l.b16 %v1139
    %v1158 = vpack.c.b16 %v1157, %v1156
    %v1176 = vunpack.c.l.b16 %v1140
    %v1177 = vunpack.c.l.b16 %v1141
    %v1178 = vunpack.c.l.b16 %v1142
    %v1179 = vunpack.c.l.b16 %v1143
    %v1180 = vunpack.c.l.b16 %v1144
    %v1181 = vunpack.c.l.b16 %v1145
    %v1182 = vunpack.c.l.b16 %v1146
    %v1183 = vunpack.c.l.b16 %v1147
    %v1184 = vunpack.c.l.b16 %v1148
    %v1185 = vunpack.c.l.b16 %v1149
    %v1186 = vunpack.c.l.b16 %v1150
    %v1187 = vunpack.c.l.b16 %v1151
    %v1188 = vunpack.c.l.b16 %v1152
    %v1189 = vunpack.c.l.b16 %v1153
    %v1190 = vunpack.c.l.b16 %v1154
    %v1191 = vunpack.c.l.b16 %v1155
    %v1192 = vpack.c.b16 %v1177, %v1176
    %v1193 = vpack.c.b16 %v1179, %v1178
    %v1194 = vpack.c.b16 %v1181, %v1180
    %v1195 = vpack.c.b16 %v1183, %v1182
    %v1196 = vpack.c.b16 %v1185, %v1184
    %v1197 = vpack.c.b16 %v1187, %v1186
    %v1198 = vpack.c.b16 %v1189, %v1188
    %v1199 = vpack.c.b16 %v1191, %v1190
    %1208 = vmatprep.subr.bf16.mxu0 0
    %1209 = vmatpush1.bf16.msra.mxu0 %v1192
    %1210 = vmatprep.subr.bf16.mxu0 0
    %1211 = vmatpush1.bf16.msra.mxu0 %v1193
    %1212 = vmatprep.subr.bf16.mxu0 0
    %1213 = vmatpush1.bf16.msra.mxu0 %v1194
    %1214 = vmatprep.subr.bf16.mxu0 0
    %1215 = vmatpush1.bf16.msra.mxu0 %v1195
    %1216 = vmatprep.subr.bf16.mxu0 0
    %1217 = vmatpush1.bf16.msra.mxu0 %v1196
    %1218 = vmatprep.subr.bf16.mxu0 0
    %1219 = vmatpush1.bf16.msra.mxu0 %v1197
    %1220 = vmatprep.subr.bf16.mxu0 0
    %1221 = vmatpush1.bf16.msra.mxu0 %v1198
    %1222 = vmatprep.subr.bf16.mxu0 0
    %1223 = vmatpush1.bf16.msra.mxu0 %v1199
    %1224 = vmatprep.subr.bf16.mxu0 0
    %1225 = vmatpush1.bf16.msra.mxu0 0
    %1226 = vmatprep.subr.bf16.mxu0 0
    %1227 = vmatpush1.bf16.msra.mxu0 0
    %1228 = vmatprep.subr.bf16.mxu0 0
    %1229 = vmatpush1.bf16.msra.mxu0 0
    %1230 = vmatprep.subr.bf16.mxu0 0
    %1231 = vmatpush1.bf16.msra.mxu0 0
    %1232 = vmatprep.subr.bf16.mxu0 0
    %1233 = vmatpush1.bf16.msra.mxu0 0
    %1234 = vmatprep.subr.bf16.mxu0 0
    %1235 = vmatpush1.bf16.msra.mxu0 0
    %1236 = vmatprep.subr.bf16.mxu0 0
    %1237 = vmatpush1.bf16.msra.mxu0 0
    %1238 = vmatprep.subr.bf16.mxu0 0
    %1239 = vmatpush1.bf16.msra.mxu0 0
    %1240 = vmatprep.mubr.bf16.mxu0 0
    %1241 = vmatmul.mubr.bf16.gmra.mrb[0].mxu0 %v1158
    %v1242 = vpop.f32.mrb[0].mxu0
    %v1243 = vadd.f32 0.0, %v1242
    %v1244 = vpop.f32.mrb[0].mxu0
    %v1245 = vpop.f32.mrb[0].mxu0
    %v1246 = vadd.f32 0.0, %v1245
    %v1247 = vpop.f32.mrb[0].mxu0
    %1248 = vdwg.mxu0
    %v1249 = vunpack.c.l.b16 %v1088
    %v1250 = vunpack.c.l.b16 %v1106
    %v1251 = vpack.c.b16 %v1250, %v1249
    %v1269 = vunpack.c.l.b16 %v1107
    %v1270 = vunpack.c.l.b16 %v1108
    %v1271 = vunpack.c.l.b16 %v1109
    %v1272 = vunpack.c.l.b16 %v1110
    %v1273 = vunpack.c.l.b16 %v1111
    %v1274 = vunpack.c.l.b16 %v1112
    %v1275 = vunpack.c.l.b16 %v1113
    %v1276 = vunpack.c.l.b16 %v1114
    %v1277 = vunpack.c.l.b16 %v1115
    %v1278 = vunpack.c.l.b16 %v1116
    %v1279 = vunpack.c.l.b16 %v1117
    %v1280 = vunpack.c.l.b16 %v1118
    %v1281 = vunpack.c.l.b16 %v1119
    %v1282 = vunpack.c.l.b16 %v1120
    %v1283 = vunpack.c.l.b16 %v1121
    %v1284 = vunpack.c.l.b16 %v1122
    %v1285 = vpack.c.b16 %v1270, %v1269
    %v1286 = vpack.c.b16 %v1272, %v1271
    %v1287 = vpack.c.b16 %v1274, %v1273
    %v1288 = vpack.c.b16 %v1276, %v1275
    %v1289 = vpack.c.b16 %v1278, %v1277
    %v1290 = vpack.c.b16 %v1280, %v1279
    %v1291 = vpack.c.b16 %v1282, %v1281
    %v1292 = vpack.c.b16 %v1284, %v1283
    %1301 = vmatprep.subr.bf16.mxu0 0
    %1302 = vmatpush1.bf16.msra.mxu0 %v1285
    %1303 = vmatprep.subr.bf16.mxu0 0
    %1304 = vmatpush1.bf16.msra.mxu0 %v1286
    %1305 = vmatprep.subr.bf16.mxu0 0
    %1306 = vmatpush1.bf16.msra.mxu0 %v1287
    %1307 = vmatprep.subr.bf16.mxu0 0
    %1308 = vmatpush1.bf16.msra.mxu0 %v1288
    %1309 = vmatprep.subr.bf16.mxu0 0
    %1310 = vmatpush1.bf16.msra.mxu0 %v1289
    %1311 = vmatprep.subr.bf16.mxu0 0
    %1312 = vmatpush1.bf16.msra.mxu0 %v1290
    %1313 = vmatprep.subr.bf16.mxu0 0
    %1314 = vmatpush1.bf16.msra.mxu0 %v1291
    %1315 = vmatprep.subr.bf16.mxu0 0
    %1316 = vmatpush1.bf16.msra.mxu0 %v1292
    %1317 = vmatprep.subr.bf16.mxu0 0
    %1318 = vmatpush1.bf16.msra.mxu0 0
    %1319 = vmatprep.subr.bf16.mxu0 0
    %1320 = vmatpush1.bf16.msra.mxu0 0
    %1321 = vmatprep.subr.bf16.mxu0 0
    %1322 = vmatpush1.bf16.msra.mxu0 0
    %1323 = vmatprep.subr.bf16.mxu0 0
    %1324 = vmatpush1.bf16.msra.mxu0 0
    %1325 = vmatprep.subr.bf16.mxu0 0
    %1326 = vmatpush1.bf16.msra.mxu0 0
    %1327 = vmatprep.subr.bf16.mxu0 0
    %1328 = vmatpush1.bf16.msra.mxu0 0
    %1329 = vmatprep.subr.bf16.mxu0 0
    %1330 = vmatpush1.bf16.msra.mxu0 0
    %1331 = vmatprep.subr.bf16.mxu0 0
    %1332 = vmatpush1.bf16.msra.mxu0 0
    %1333 = vmatprep.mubr.bf16.mxu0 0
    %1334 = vmatmul.mubr.bf16.gmra.mrb[0].mxu0 %v1251
    %v1335 = vpop.f32.mrb[0].mxu0
    %v1336 = vadd.f32 %v1243, %v1335
    %v1337 = vpop.f32.mrb[0].mxu0
    %v1338 = vpop.f32.mrb[0].mxu0
    %v1339 = vadd.f32 %v1246, %v1338
    %v1340 = vpop.f32.mrb[0].mxu0
    %1341 = vdwg.mxu0
    %v1342 = vld [vmem:[#allocation2 + $0x4] sm:$0xf]
    %v1343 = vld [vmem:[#allocation2 + $0x10] sm:$0xf]
    %vm1344 = vsmask.f32 256
    %vm1345 = vsmask.f32 4368
    %vm1346 = vmor %vm1344, %vm1345
    %v1348 = vshrl.u32 %v1123, 16
    %v1350 = vrot.slane %v1348, 7
    %v1351 = vrot.slane %v1350, 4
    %v1353 = vshrl.u32 %v1342, 16
    %v1355 = vrot.slane %v1353, 7
    %v1356 = vshll.u32 %v1342, 16
    %v1358 = vor.u32 %v1355, %v1356
    %v1359 = vsel %vm1346, %v1351, %v1358
    %v1361 = vshrl.u32 %v1124, 16
    %v1363 = vrot.slane %v1361, 7
    %v1364 = vrot.slane %v1363, 4
    %v1366 = vshrl.u32 %v1343, 16
    %v1368 = vrot.slane %v1366, 7
    %v1369 = vshll.u32 %v1343, 16
    %v1371 = vor.u32 %v1368, %v1369
    %v1372 = vsel %vm1346, %v1364, %v1371
    %v1373 = vld [vmem:[#allocation6 + $0x80] sm:$0xf]
    %v1374 = vld [vmem:[#allocation6 + $0x84] sm:$0xf]
    %v1375 = vld [vmem:[#allocation6 + $0x88] sm:$0xf]
    %v1376 = vld [vmem:[#allocation6 + $0x8c] sm:$0xf]
    %v1377 = vld [vmem:[#allocation6 + $0x90] sm:$0xf]
    %v1378 = vld [vmem:[#allocation6 + $0x94] sm:$0xf]
    %v1379 = vld [vmem:[#allocation6 + $0x98] sm:$0xf]
    %v1380 = vld [vmem:[#allocation6 + $0x9c] sm:$0xf]
    %v1381 = vld [vmem:[#allocation6 + $0xa0] sm:$0xf]
    %v1382 = vld [vmem:[#allocation6 + $0xa4] sm:$0xf]
    %v1383 = vld [vmem:[#allocation6 + $0xa8] sm:$0xf]
    %v1384 = vld [vmem:[#allocation6 + $0xac] sm:$0xf]
    %v1385 = vld [vmem:[#allocation6 + $0xb0] sm:$0xf]
    %v1386 = vld [vmem:[#allocation6 + $0xb4] sm:$0xf]
    %v1387 = vld [vmem:[#allocation6 + $0xb8] sm:$0xf]
    %v1388 = vld [vmem:[#allocation6 + $0xbc] sm:$0xf]
    %v1389 = vunpack.c.l.b16 %v1359
    %v1390 = vunpack.c.l.b16 %v1372
    %v1391 = vpack.c.b16 %v1390, %v1389
    %v1409 = vunpack.c.l.b16 %v1373
    %v1410 = vunpack.c.l.b16 %v1374
    %v1411 = vunpack.c.l.b16 %v1375
    %v1412 = vunpack.c.l.b16 %v1376
    %v1413 = vunpack.c.l.b16 %v1377
    %v1414 = vunpack.c.l.b16 %v1378
    %v1415 = vunpack.c.l.b16 %v1379
    %v1416 = vunpack.c.l.b16 %v1380
    %v1417 = vunpack.c.l.b16 %v1381
    %v1418 = vunpack.c.l.b16 %v1382
    %v1419 = vunpack.c.l.b16 %v1383
    %v1420 = vunpack.c.l.b16 %v1384
    %v1421 = vunpack.c.l.b16 %v1385
    %v1422 = vunpack.c.l.b16 %v1386
    %v1423 = vunpack.c.l.b16 %v1387
    %v1424 = vunpack.c.l.b16 %v1388
    %v1425 = vpack.c.b16 %v1410, %v1409
    %v1426 = vpack.c.b16 %v1412, %v1411
    %v1427 = vpack.c.b16 %v1414, %v1413
    %v1428 = vpack.c.b16 %v1416, %v1415
    %v1429 = vpack.c.b16 %v1418, %v1417
    %v1430 = vpack.c.b16 %v1420, %v1419
    %v1431 = vpack.c.b16 %v1422, %v1421
    %v1432 = vpack.c.b16 %v1424, %v1423
    %1441 = vmatprep.subr.bf16.mxu0 0
    %1442 = vmatpush1.bf16.msra.mxu0 %v1425
    %1443 = vmatprep.subr.bf16.mxu0 0
    %1444 = vmatpush1.bf16.msra.mxu0 %v1426
    %1445 = vmatprep.subr.bf16.mxu0 0
    %1446 = vmatpush1.bf16.msra.mxu0 %v1427
    %1447 = vmatprep.subr.bf16.mxu0 0
    %1448 = vmatpush1.bf16.msra.mxu0 %v1428
    %1449 = vmatprep.subr.bf16.mxu0 0
    %1450 = vmatpush1.bf16.msra.mxu0 %v1429
    %1451 = vmatprep.subr.bf16.mxu0 0
    %1452 = vmatpush1.bf16.msra.mxu0 %v1430
    %1453 = vmatprep.subr.bf16.mxu0 0
    %1454 = vmatpush1.bf16.msra.mxu0 %v1431
    %1455 = vmatprep.subr.bf16.mxu0 0
    %1456 = vmatpush1.bf16.msra.mxu0 %v1432
    %1457 = vmatprep.subr.bf16.mxu0 0
    %1458 = vmatpush1.bf16.msra.mxu0 0
    %1459 = vmatprep.subr.bf16.mxu0 0
    %1460 = vmatpush1.bf16.msra.mxu0 0
    %1461 = vmatprep.subr.bf16.mxu0 0
    %1462 = vmatpush1.bf16.msra.mxu0 0
    %1463 = vmatprep.subr.bf16.mxu0 0
    %1464 = vmatpush1.bf16.msra.mxu0 0
    %1465 = vmatprep.subr.bf16.mxu0 0
    %1466 = vmatpush1.bf16.msra.mxu0 0
    %1467 = vmatprep.subr.bf16.mxu0 0
    %1468 = vmatpush1.bf16.msra.mxu0 0
    %1469 = vmatprep.subr.bf16.mxu0 0
    %1470 = vmatpush1.bf16.msra.mxu0 0
    %1471 = vmatprep.subr.bf16.mxu0 0
    %1472 = vmatpush1.bf16.msra.mxu0 0
    %1473 = vmatprep.mubr.bf16.mxu0 0
    %1474 = vmatmul.mubr.bf16.gmra.mrb[0].mxu0 %v1391
    %v1475 = vpop.f32.mrb[0].mxu0
    %v1476 = vadd.f32 0.0, %v1475
    %v1477 = vpop.f32.mrb[0].mxu0
    %v1478 = vpop.f32.mrb[0].mxu0
    %v1479 = vadd.f32 0.0, %v1478
    %v1480 = vpop.f32.mrb[0].mxu0
    %1481 = vdwg.mxu0
    %v1482 = vadd.f32 %v1336, %v1476
    %v1483 = vadd.f32 %v1339, %v1479
    %v1484 = vld [vmem:[#allocation6 + $0xc0] sm:$0xf]
    %v1485 = vld [vmem:[#allocation6 + $0xc4] sm:$0xf]
    %v1486 = vld [vmem:[#allocation6 + $0xc8] sm:$0xf]
    %v1487 = vld [vmem:[#allocation6 + $0xcc] sm:$0xf]
    %v1488 = vld [vmem:[#allocation6 + $0xd0] sm:$0xf]
    %v1489 = vld [vmem:[#allocation6 + $0xd4] sm:$0xf]
    %v1490 = vld [vmem:[#allocation6 + $0xd8] sm:$0xf]
    %v1491 = vld [vmem:[#allocation6 + $0xdc] sm:$0xf]
    %v1492 = vld [vmem:[#allocation6 + $0xe0] sm:$0xf]
    %v1493 = vld [vmem:[#allocation6 + $0xe4] sm:$0xf]
    %v1494 = vld [vmem:[#allocation6 + $0xe8] sm:$0xf]
    %v1495 = vld [vmem:[#allocation6 + $0xec] sm:$0xf]
    %v1496 = vld [vmem:[#allocation6 + $0xf0] sm:$0xf]
    %v1497 = vld [vmem:[#allocation6 + $0xf4] sm:$0xf]
    %v1498 = vld [vmem:[#allocation6 + $0xf8] sm:$0xf]
    %v1499 = vld [vmem:[#allocation6 + $0xfc] sm:$0xf]
    %v1502 = vunpack.c.l.b16 %v1342
    %v1503 = vunpack.c.l.b16 %v1343
    %v1504 = vpack.c.b16 %v1503, %v1502
    %v1522 = vunpack.c.l.b16 %v1484
    %v1523 = vunpack.c.l.b16 %v1485
    %v1524 = vunpack.c.l.b16 %v1486
    %v1525 = vunpack.c.l.b16 %v1487
    %v1526 = vunpack.c.l.b16 %v1488
    %v1527 = vunpack.c.l.b16 %v1489
    %v1528 = vunpack.c.l.b16 %v1490
    %v1529 = vunpack.c.l.b16 %v1491
    %v1530 = vunpack.c.l.b16 %v1492
    %v1531 = vunpack.c.l.b16 %v1493
    %v1532 = vunpack.c.l.b16 %v1494
    %v1533 = vunpack.c.l.b16 %v1495
    %v1534 = vunpack.c.l.b16 %v1496
    %v1535 = vunpack.c.l.b16 %v1497
    %v1536 = vunpack.c.l.b16 %v1498
    %v1537 = vunpack.c.l.b16 %v1499
    %v1538 = vpack.c.b16 %v1523, %v1522
    %v1539 = vpack.c.b16 %v1525, %v1524
    %v1540 = vpack.c.b16 %v1527, %v1526
    %v1541 = vpack.c.b16 %v1529, %v1528
    %v1542 = vpack.c.b16 %v1531, %v1530
    %v1543 = vpack.c.b16 %v1533, %v1532
    %v1544 = vpack.c.b16 %v1535, %v1534
    %v1545 = vpack.c.b16 %v1537, %v1536
    %1554 = vmatprep.subr.bf16.mxu0 0
    %1555 = vmatpush1.bf16.msra.mxu0 %v1538
    %1556 = vmatprep.subr.bf16.mxu0 0
    %1557 = vmatpush1.bf16.msra.mxu0 %v1539
    %1558 = vmatprep.subr.bf16.mxu0 0
    %1559 = vmatpush1.bf16.msra.mxu0 %v1540
    %1560 = vmatprep.subr.bf16.mxu0 0
    %1561 = vmatpush1.bf16.msra.mxu0 %v1541
    %1562 = vmatprep.subr.bf16.mxu0 0
    %1563 = vmatpush1.bf16.msra.mxu0 %v1542
    %1564 = vmatprep.subr.bf16.mxu0 0
    %1565 = vmatpush1.bf16.msra.mxu0 %v1543
    %1566 = vmatprep.subr.bf16.mxu0 0
    %1567 = vmatpush1.bf16.msra.mxu0 %v1544
    %1568 = vmatprep.subr.bf16.mxu0 0
    %1569 = vmatpush1.bf16.msra.mxu0 %v1545
    %1570 = vmatprep.subr.bf16.mxu0 0
    %1571 = vmatpush1.bf16.msra.mxu0 0
    %1572 = vmatprep.subr.bf16.mxu0 0
    %1573 = vmatpush1.bf16.msra.mxu0 0
    %1574 = vmatprep.subr.bf16.mxu0 0
    %1575 = vmatpush1.bf16.msra.mxu0 0
    %1576 = vmatprep.subr.bf16.mxu0 0
    %1577 = vmatpush1.bf16.msra.mxu0 0
    %1578 = vmatprep.subr.bf16.mxu0 0
    %1579 = vmatpush1.bf16.msra.mxu0 0
    %1580 = vmatprep.subr.bf16.mxu0 0
    %1581 = vmatpush1.bf16.msra.mxu0 0
    %1582 = vmatprep.subr.bf16.mxu0 0
    %1583 = vmatpush1.bf16.msra.mxu0 0
    %1584 = vmatprep.subr.bf16.mxu0 0
    %1585 = vmatpush1.bf16.msra.mxu0 0
    %1586 = vmatprep.mubr.bf16.mxu0 0
    %1587 = vmatmul.mubr.bf16.gmra.mrb[0].mxu0 %v1504
    %v1588 = vpop.f32.mrb[0].mxu0
    %v1589 = vadd.f32 0.0, %v1588
    %v1590 = vpop.f32.mrb[0].mxu0
    %v1591 = vpop.f32.mrb[0].mxu0
    %v1592 = vadd.f32 0.0, %v1591
    %v1593 = vpop.f32.mrb[0].mxu0
    %1594 = vdwg.mxu0
    %v1595 = vadd.f32 %v1482, %v1589
    %v1596 = vadd.f32 %v1483, %v1592
    %v1597 = vld [vmem:[#allocation2 + $0x4] sm:$0xf]
    %v1598 = vld [vmem:[#allocation2 + $0x8] sm:$0x1]
    %v1599 = vld [vmem:[#allocation2 + $0x10] sm:$0xf]
    %v1600 = vld [vmem:[#allocation2 + $0x14] sm:$0x1]
    %v1602 = vshrl.u32 %v1597, 16
    %v1604 = vrot.slane %v1602, 4
    %v1605 = vshll.u32 %v1597, 16
    %v1607 = vrot.slane %v1605, 5
    %v1608 = vor.u32 %v1604, %v1607
    %v1609 = vrot.slane %v1608, 4
    %v1611 = vshll.u32 %v1598, 16
    %v1613 = vrot.slane %v1611, 5
    %v1614 = vsel %vm303, %v1609, %v1613
    %v1616 = vshrl.u32 %v1599, 16
    %v1618 = vrot.slane %v1616, 4
    %v1619 = vshll.u32 %v1599, 16
    %v1621 = vrot.slane %v1619, 5
    %v1622 = vor.u32 %v1618, %v1621
    %v1623 = vrot.slane %v1622, 4
    %v1625 = vshll.u32 %v1600, 16
    %v1627 = vrot.slane %v1625, 5
    %v1628 = vsel %vm303, %v1623, %v1627
    %v1629 = vld [vmem:[#allocation6 + $0x100] sm:$0xf]
    %v1630 = vld [vmem:[#allocation6 + $0x104] sm:$0xf]
    %v1631 = vld [vmem:[#allocation6 + $0x108] sm:$0xf]
    %v1632 = vld [vmem:[#allocation6 + $0x10c] sm:$0xf]
    %v1633 = vld [vmem:[#allocation6 + $0x110] sm:$0xf]
    %v1634 = vld [vmem:[#allocation6 + $0x114] sm:$0xf]
    %v1635 = vld [vmem:[#allocation6 + $0x118] sm:$0xf]
    %v1636 = vld [vmem:[#allocation6 + $0x11c] sm:$0xf]
    %v1637 = vld [vmem:[#allocation6 + $0x120] sm:$0xf]
    %v1638 = vld [vmem:[#allocation6 + $0x124] sm:$0xf]
    %v1639 = vld [vmem:[#allocation6 + $0x128] sm:$0xf]
    %v1640 = vld [vmem:[#allocation6 + $0x12c] sm:$0xf]
    %v1641 = vld [vmem:[#allocation6 + $0x130] sm:$0xf]
    %v1642 = vld [vmem:[#allocation6 + $0x134] sm:$0xf]
    %v1643 = vld [vmem:[#allocation6 + $0x138] sm:$0xf]
    %v1644 = vld [vmem:[#allocation6 + $0x13c] sm:$0xf]
    %v1645 = vunpack.c.l.b16 %v1614
    %v1646 = vunpack.c.l.b16 %v1628
    %v1647 = vpack.c.b16 %v1646, %v1645
    %v1665 = vunpack.c.l.b16 %v1629
    %v1666 = vunpack.c.l.b16 %v1630
    %v1667 = vunpack.c.l.b16 %v1631
    %v1668 = vunpack.c.l.b16 %v1632
    %v1669 = vunpack.c.l.b16 %v1633
    %v1670 = vunpack.c.l.b16 %v1634
    %v1671 = vunpack.c.l.b16 %v1635
    %v1672 = vunpack.c.l.b16 %v1636
    %v1673 = vunpack.c.l.b16 %v1637
    %v1674 = vunpack.c.l.b16 %v1638
    %v1675 = vunpack.c.l.b16 %v1639
    %v1676 = vunpack.c.l.b16 %v1640
    %v1677 = vunpack.c.l.b16 %v1641
    %v1678 = vunpack.c.l.b16 %v1642
    %v1679 = vunpack.c.l.b16 %v1643
    %v1680 = vunpack.c.l.b16 %v1644
    %v1681 = vpack.c.b16 %v1666, %v1665
    %v1682 = vpack.c.b16 %v1668, %v1667
    %v1683 = vpack.c.b16 %v1670, %v1669
    %v1684 = vpack.c.b16 %v1672, %v1671
    %v1685 = vpack.c.b16 %v1674, %v1673
    %v1686 = vpack.c.b16 %v1676, %v1675
    %v1687 = vpack.c.b16 %v1678, %v1677
    %v1688 = vpack.c.b16 %v1680, %v1679
    %1697 = vmatprep.subr.bf16.mxu0 0
    %1698 = vmatpush1.bf16.msra.mxu0 %v1681
    %1699 = vmatprep.subr.bf16.mxu0 0
    %1700 = vmatpush1.bf16.msra.mxu0 %v1682
    %1701 = vmatprep.subr.bf16.mxu0 0
    %1702 = vmatpush1.bf16.msra.mxu0 %v1683
    %1703 = vmatprep.subr.bf16.mxu0 0
    %1704 = vmatpush1.bf16.msra.mxu0 %v1684
    %1705 = vmatprep.subr.bf16.mxu0 0
    %1706 = vmatpush1.bf16.msra.mxu0 %v1685
    %1707 = vmatprep.subr.bf16.mxu0 0
    %1708 = vmatpush1.bf16.msra.mxu0 %v1686
    %1709 = vmatprep.subr.bf16.mxu0 0
    %1710 = vmatpush1.bf16.msra.mxu0 %v1687
    %1711 = vmatprep.subr.bf16.mxu0 0
    %1712 = vmatpush1.bf16.msra.mxu0 %v1688
    %1713 = vmatprep.subr.bf16.mxu0 0
    %1714 = vmatpush1.bf16.msra.mxu0 0
    %1715 = vmatprep.subr.bf16.mxu0 0
    %1716 = vmatpush1.bf16.msra.mxu0 0
    %1717 = vmatprep.subr.bf16.mxu0 0
    %1718 = vmatpush1.bf16.msra.mxu0 0
    %1719 = vmatprep.subr.bf16.mxu0 0
    %1720 = vmatpush1.bf16.msra.mxu0 0
    %1721 = vmatprep.subr.bf16.mxu0 0
    %1722 = vmatpush1.bf16.msra.mxu0 0
    %1723 = vmatprep.subr.bf16.mxu0 0
    %1724 = vmatpush1.bf16.msra.mxu0 0
    %1725 = vmatprep.subr.bf16.mxu0 0
    %1726 = vmatpush1.bf16.msra.mxu0 0
    %1727 = vmatprep.subr.bf16.mxu0 0
    %1728 = vmatpush1.bf16.msra.mxu0 0
    %1729 = vmatprep.mubr.bf16.mxu0 0
    %1730 = vmatmul.mubr.bf16.gmra.mrb[0].mxu0 %v1647
    %v1731 = vpop.f32.mrb[0].mxu0
    %v1732 = vadd.f32 0.0, %v1731
    %v1733 = vpop.f32.mrb[0].mxu0
    %v1734 = vpop.f32.mrb[0].mxu0
    %v1735 = vadd.f32 0.0, %v1734
    %v1736 = vpop.f32.mrb[0].mxu0
    %1737 = vdwg.mxu0
    %v1738 = vadd.f32 %v1595, %v1732
    %v1739 = vadd.f32 %v1596, %v1735
    %v1740 = vld [vmem:[#allocation2 + $0x4] sm:$0xe]
    %v1741 = vld [vmem:[#allocation2 + $0x10] sm:$0xe]
    %v1746 = vrot.slane %v1740, 5
    %v1747 = vrot.slane %v1746, 4
    %v1748 = vrot.slane %v1598, 5
    %v1749 = vsel %vm594, %v1747, %v1748
    %v1750 = vrot.slane %v1741, 5
    %v1751 = vrot.slane %v1750, 4
    %v1752 = vrot.slane %v1600, 5
    %v1753 = vsel %vm594, %v1751, %v1752
    %v1754 = vld [vmem:[#allocation6 + $0x140] sm:$0xf]
    %v1755 = vld [vmem:[#allocation6 + $0x144] sm:$0xf]
    %v1756 = vld [vmem:[#allocation6 + $0x148] sm:$0xf]
    %v1757 = vld [vmem:[#allocation6 + $0x14c] sm:$0xf]
    %v1758 = vld [vmem:[#allocation6 + $0x150] sm:$0xf]
    %v1759 = vld [vmem:[#allocation6 + $0x154] sm:$0xf]
    %v1760 = vld [vmem:[#allocation6 + $0x158] sm:$0xf]
    %v1761 = vld [vmem:[#allocation6 + $0x15c] sm:$0xf]
    %v1762 = vld [vmem:[#allocation6 + $0x160] sm:$0xf]
    %v1763 = vld [vmem:[#allocation6 + $0x164] sm:$0xf]
    %v1764 = vld [vmem:[#allocation6 + $0x168] sm:$0xf]
    %v1765 = vld [vmem:[#allocation6 + $0x16c] sm:$0xf]
    %v1766 = vld [vmem:[#allocation6 + $0x170] sm:$0xf]
    %v1767 = vld [vmem:[#allocation6 + $0x174] sm:$0xf]
    %v1768 = vld [vmem:[#allocation6 + $0x178] sm:$0xf]
    %v1769 = vld [vmem:[#allocation6 + $0x17c] sm:$0xf]
    %v1770 = vunpack.c.l.b16 %v1749
    %v1771 = vunpack.c.l.b16 %v1753
    %v1772 = vpack.c.b16 %v1771, %v1770
    %v1790 = vunpack.c.l.b16 %v1754
    %v1791 = vunpack.c.l.b16 %v1755
    %v1792 = vunpack.c.l.b16 %v1756
    %v1793 = vunpack.c.l.b16 %v1757
    %v1794 = vunpack.c.l.b16 %v1758
    %v1795 = vunpack.c.l.b16 %v1759
    %v1796 = vunpack.c.l.b16 %v1760
    %v1797 = vunpack.c.l.b16 %v1761
    %v1798 = vunpack.c.l.b16 %v1762
    %v1799 = vunpack.c.l.b16 %v1763
    %v1800 = vunpack.c.l.b16 %v1764
    %v1801 = vunpack.c.l.b16 %v1765
    %v1802 = vunpack.c.l.b16 %v1766
    %v1803 = vunpack.c.l.b16 %v1767
    %v1804 = vunpack.c.l.b16 %v1768
    %v1805 = vunpack.c.l.b16 %v1769
    %v1806 = vpack.c.b16 %v1791, %v1790
    %v1807 = vpack.c.b16 %v1793, %v1792
    %v1808 = vpack.c.b16 %v1795, %v1794
    %v1809 = vpack.c.b16 %v1797, %v1796
    %v1810 = vpack.c.b16 %v1799, %v1798
    %v1811 = vpack.c.b16 %v1801, %v1800
    %v1812 = vpack.c.b16 %v1803, %v1802
    %v1813 = vpack.c.b16 %v1805, %v1804
    %1822 = vmatprep.subr.bf16.mxu0 0
    %1823 = vmatpush1.bf16.msra.mxu0 %v1806
    %1824 = vmatprep.subr.bf16.mxu0 0
    %1825 = vmatpush1.bf16.msra.mxu0 %v1807
    %1826 = vmatprep.subr.bf16.mxu0 0
    %1827 = vmatpush1.bf16.msra.mxu0 %v1808
    %1828 = vmatprep.subr.bf16.mxu0 0
    %1829 = vmatpush1.bf16.msra.mxu0 %v1809
    %1830 = vmatprep.subr.bf16.mxu0 0
    %1831 = vmatpush1.bf16.msra.mxu0 %v1810
    %1832 = vmatprep.subr.bf16.mxu0 0
    %1833 = vmatpush1.bf16.msra.mxu0 %v1811
    %1834 = vmatprep.subr.bf16.mxu0 0
    %1835 = vmatpush1.bf16.msra.mxu0 %v1812
    %1836 = vmatprep.subr.bf16.mxu0 0
    %1837 = vmatpush1.bf16.msra.mxu0 %v1813
    %1838 = vmatprep.subr.bf16.mxu0 0
    %1839 = vmatpush1.bf16.msra.mxu0 0
    %1840 = vmatprep.subr.bf16.mxu0 0
    %1841 = vmatpush1.bf16.msra.mxu0 0
    %1842 = vmatprep.subr.bf16.mxu0 0
    %1843 = vmatpush1.bf16.msra.mxu0 0
    %1844 = vmatprep.subr.bf16.mxu0 0
    %1845 = vmatpush1.bf16.msra.mxu0 0
    %1846 = vmatprep.subr.bf16.mxu0 0
    %1847 = vmatpush1.bf16.msra.mxu0 0
    %1848 = vmatprep.subr.bf16.mxu0 0
    %1849 = vmatpush1.bf16.msra.mxu0 0
    %1850 = vmatprep.subr.bf16.mxu0 0
    %1851 = vmatpush1.bf16.msra.mxu0 0
    %1852 = vmatprep.subr.bf16.mxu0 0
    %1853 = vmatpush1.bf16.msra.mxu0 0
    %1854 = vmatprep.mubr.bf16.mxu0 0
    %1855 = vmatmul.mubr.bf16.gmra.mrb[0].mxu0 %v1772
    %v1856 = vpop.f32.mrb[0].mxu0
    %v1857 = vadd.f32 0.0, %v1856
    %v1858 = vpop.f32.mrb[0].mxu0
    %v1859 = vpop.f32.mrb[0].mxu0
    %v1860 = vadd.f32 0.0, %v1859
    %v1861 = vpop.f32.mrb[0].mxu0
    %1862 = vdwg.mxu0
    %v1863 = vadd.f32 %v1738, %v1857
    %v1864 = vadd.f32 %v1739, %v1860
    %v1865 = vld [vmem:[#allocation2 + $0x8] sm:$0x3]
    %v1866 = vld [vmem:[#allocation2 + $0x14] sm:$0x3]
    %v1868 = vshrl.u32 %v1740, 16
    %v1870 = vrot.slane %v1868, 5
    %v1871 = vshll.u32 %v1740, 16
    %v1873 = vrot.slane %v1871, 6
    %v1874 = vor.u32 %v1870, %v1873
    %v1875 = vrot.slane %v1874, 4
    %v1877 = vshrl.u32 %v1865, 16
    %v1879 = vrot.slane %v1877, 5
    %v1880 = vshll.u32 %v1865, 16
    %v1882 = vrot.slane %v1880, 6
    %v1883 = vor.u32 %v1879, %v1882
    %v1884 = vsel %vm843, %v1875, %v1883
    %v1886 = vshrl.u32 %v1741, 16
    %v1888 = vrot.slane %v1886, 5
    %v1889 = vshll.u32 %v1741, 16
    %v1891 = vrot.slane %v1889, 6
    %v1892 = vor.u32 %v1888, %v1891
    %v1893 = vrot.slane %v1892, 4
    %v1895 = vshrl.u32 %v1866, 16
    %v1897 = vrot.slane %v1895, 5
    %v1898 = vshll.u32 %v1866, 16
    %v1900 = vrot.slane %v1898, 6
    %v1901 = vor.u32 %v1897, %v1900
    %v1902 = vsel %vm843, %v1893, %v1901
    %v1903 = vld [vmem:[#allocation6 + $0x180] sm:$0xf]
    %v1904 = vld [vmem:[#allocation6 + $0x184] sm:$0xf]
    %v1905 = vld [vmem:[#allocation6 + $0x188] sm:$0xf]
    %v1906 = vld [vmem:[#allocation6 + $0x18c] sm:$0xf]
    %v1907 = vld [vmem:[#allocation6 + $0x190] sm:$0xf]
    %v1908 = vld [vmem:[#allocation6 + $0x194] sm:$0xf]
    %v1909 = vld [vmem:[#allocation6 + $0x198] sm:$0xf]
    %v1910 = vld [vmem:[#allocation6 + $0x19c] sm:$0xf]
    %v1911 = vld [vmem:[#allocation6 + $0x1a0] sm:$0xf]
    %v1912 = vld [vmem:[#allocation6 + $0x1a4] sm:$0xf]
    %v1913 = vld [vmem:[#allocation6 + $0x1a8] sm:$0xf]
    %v1914 = vld [vmem:[#allocation6 + $0x1ac] sm:$0xf]
    %v1915 = vld [vmem:[#allocation6 + $0x1b0] sm:$0xf]
    %v1916 = vld [vmem:[#allocation6 + $0x1b4] sm:$0xf]
    %v1917 = vld [vmem:[#allocation6 + $0x1b8] sm:$0xf]
    %v1918 = vld [vmem:[#allocation6 + $0x1bc] sm:$0xf]
    %v1919 = vunpack.c.l.b16 %v1884
    %v1920 = vunpack.c.l.b16 %v1902
    %v1921 = vpack.c.b16 %v1920, %v1919
    %v1939 = vunpack.c.l.b16 %v1903
    %v1940 = vunpack.c.l.b16 %v1904
    %v1941 = vunpack.c.l.b16 %v1905
    %v1942 = vunpack.c.l.b16 %v1906
    %v1943 = vunpack.c.l.b16 %v1907
    %v1944 = vunpack.c.l.b16 %v1908
    %v1945 = vunpack.c.l.b16 %v1909
    %v1946 = vunpack.c.l.b16 %v1910
    %v1947 = vunpack.c.l.b16 %v1911
    %v1948 = vunpack.c.l.b16 %v1912
    %v1949 = vunpack.c.l.b16 %v1913
    %v1950 = vunpack.c.l.b16 %v1914
    %v1951 = vunpack.c.l.b16 %v1915
    %v1952 = vunpack.c.l.b16 %v1916
    %v1953 = vunpack.c.l.b16 %v1917
    %v1954 = vunpack.c.l.b16 %v1918
    %v1955 = vpack.c.b16 %v1940, %v1939
    %v1956 = vpack.c.b16 %v1942, %v1941
    %v1957 = vpack.c.b16 %v1944, %v1943
    %v1958 = vpack.c.b16 %v1946, %v1945
    %v1959 = vpack.c.b16 %v1948, %v1947
    %v1960 = vpack.c.b16 %v1950, %v1949
    %v1961 = vpack.c.b16 %v1952, %v1951
    %v1962 = vpack.c.b16 %v1954, %v1953
    %1971 = vmatprep.subr.bf16.mxu0 0
    %1972 = vmatpush1.bf16.msra.mxu0 %v1955
    %1973 = vmatprep.subr.bf16.mxu0 0
    %1974 = vmatpush1.bf16.msra.mxu0 %v1956
    %1975 = vmatprep.subr.bf16.mxu0 0
    %1976 = vmatpush1.bf16.msra.mxu0 %v1957
    %1977 = vmatprep.subr.bf16.mxu0 0
    %1978 = vmatpush1.bf16.msra.mxu0 %v1958
    %1979 = vmatprep.subr.bf16.mxu0 0
    %1980 = vmatpush1.bf16.msra.mxu0 %v1959
    %1981 = vmatprep.subr.bf16.mxu0 0
    %1982 = vmatpush1.bf16.msra.mxu0 %v1960
    %1983 = vmatprep.subr.bf16.mxu0 0
    %1984 = vmatpush1.bf16.msra.mxu0 %v1961
    %1985 = vmatprep.subr.bf16.mxu0 0
    %1986 = vmatpush1.bf16.msra.mxu0 %v1962
    %1987 = vmatprep.subr.bf16.mxu0 0
    %1988 = vmatpush1.bf16.msra.mxu0 0
    %1989 = vmatprep.subr.bf16.mxu0 0
    %1990 = vmatpush1.bf16.msra.mxu0 0
    %1991 = vmatprep.subr.bf16.mxu0 0
    %1992 = vmatpush1.bf16.msra.mxu0 0
    %1993 = vmatprep.subr.bf16.mxu0 0
    %1994 = vmatpush1.bf16.msra.mxu0 0
    %1995 = vmatprep.subr.bf16.mxu0 0
    %1996 = vmatpush1.bf16.msra.mxu0 0
    %1997 = vmatprep.subr.bf16.mxu0 0
    %1998 = vmatpush1.bf16.msra.mxu0 0
    %1999 = vmatprep.subr.bf16.mxu0 0
    %2000 = vmatpush1.bf16.msra.mxu0 0
    %2001 = vmatprep.subr.bf16.mxu0 0
    %2002 = vmatpush1.bf16.msra.mxu0 0
    %2003 = vmatprep.mubr.bf16.mxu0 0
    %2004 = vmatmul.mubr.bf16.gmra.mrb[0].mxu0 %v1921
    %v2005 = vpop.f32.mrb[0].mxu0
    %v2006 = vadd.f32 0.0, %v2005
    %v2007 = vpop.f32.mrb[0].mxu0
    %v2008 = vpop.f32.mrb[0].mxu0
    %v2009 = vadd.f32 0.0, %v2008
    %v2010 = vpop.f32.mrb[0].mxu0
    %2011 = vdwg.mxu0
    %v2012 = vadd.f32 %v1863, %v2006
    %v2013 = vadd.f32 %v1864, %v2009
    %v2014 = vld [vmem:[%s7] sm:$0x1]
    %v2016 = vlaneseq
    %v2017 = vshrl.u32 %v2016, 7
    %v2018 = vsub.s32 0, %v2017
    %v2019 = vrot.slane %v2014, %v2018
    %v2021 = vadd.f32 %v2012, %v2019
    %v2022 = vadd.f32 %v2013, %v2019
    %v2023 = vld [vmem:[%s1] sm:$0xf]
    %v2024 = vld [vmem:[%s1 + $0x4] sm:$0x1]
    %v2025 = vld [vmem:[%s1 + $0x8] sm:$0xf]
    %v2026 = vld [vmem:[%s1 + $0xc] sm:$0x1]
    %v2028 = vshrl.u32 %v2023, 16
    %v2030 = vrot.slane %v2028, 4
    %v2031 = vshll.u32 %v2023, 16
    %v2033 = vrot.slane %v2031, 5
    %v2034 = vor.u32 %v2030, %v2033
    %v2035 = vrot.slane %v2034, 4
    %v2037 = vshll.u32 %v2024, 16
    %v2039 = vrot.slane %v2037, 5
    %v2040 = vsel %vm303, %v2035, %v2039
    %v2042 = vshrl.u32 %v2025, 16
    %v2044 = vrot.slane %v2042, 4
    %v2045 = vshll.u32 %v2025, 16
    %v2047 = vrot.slane %v2045, 5
    %v2048 = vor.u32 %v2044, %v2047
    %v2049 = vrot.slane %v2048, 4
    %v2051 = vshll.u32 %v2026, 16
    %v2053 = vrot.slane %v2051, 5
    %v2054 = vsel %vm303, %v2049, %v2053
    %v2055 = vld [vmem:[%s8] sm:$0xf]
    %v2056 = vld [vmem:[%s8 + $0x4] sm:$0xf]
    %v2057 = vld [vmem:[%s8 + $0x8] sm:$0xf]
    %v2058 = vld [vmem:[%s8 + $0xc] sm:$0xf]
    %v2059 = vld [vmem:[%s8 + $0x10] sm:$0xf]
    %v2060 = vld [vmem:[%s8 + $0x14] sm:$0xf]
    %v2061 = vld [vmem:[%s8 + $0x18] sm:$0xf]
    %v2062 = vld [vmem:[%s8 + $0x1c] sm:$0xf]
    %v2063 = vld [vmem:[%s8 + $0x20] sm:$0xf]
    %v2064 = vld [vmem:[%s8 + $0x24] sm:$0xf]
    %v2065 = vld [vmem:[%s8 + $0x28] sm:$0xf]
    %v2066 = vld [vmem:[%s8 + $0x2c] sm:$0xf]
    %v2067 = vld [vmem:[%s8 + $0x30] sm:$0xf]
    %v2068 = vld [vmem:[%s8 + $0x34] sm:$0xf]
    %v2069 = vld [vmem:[%s8 + $0x38] sm:$0xf]
    %v2070 = vld [vmem:[%s8 + $0x3c] sm:$0xf]
    %v2071 = vld [vmem:[%s9] sm:$0x1]
    %v2073 = vlaneseq
    %v2074 = vshrl.u32 %v2073, 7
    %v2075 = vsub.s32 0, %v2074
    %v2076 = vrot.slane %v2071, %v2075
    %v2078 = vunpack.c.l.b16 %v2040
    %v2079 = vunpack.c.l.b16 %v2054
    %v2080 = vpack.c.b16 %v2079, %v2078
    %v2098 = vunpack.c.l.b16 %v2055
    %v2099 = vunpack.c.l.b16 %v2056
    %v2100 = vunpack.c.l.b16 %v2057
    %v2101 = vunpack.c.l.b16 %v2058
    %v2102 = vunpack.c.l.b16 %v2059
    %v2103 = vunpack.c.l.b16 %v2060
    %v2104 = vunpack.c.l.b16 %v2061
    %v2105 = vunpack.c.l.b16 %v2062
    %v2106 = vunpack.c.l.b16 %v2063
    %v2107 = vunpack.c.l.b16 %v2064
    %v2108 = vunpack.c.l.b16 %v2065
    %v2109 = vunpack.c.l.b16 %v2066
    %v2110 = vunpack.c.l.b16 %v2067
    %v2111 = vunpack.c.l.b16 %v2068
    %v2112 = vunpack.c.l.b16 %v2069
    %v2113 = vunpack.c.l.b16 %v2070
    %v2114 = vpack.c.b16 %v2099, %v2098
    %v2115 = vpack.c.b16 %v2101, %v2100
    %v2116 = vpack.c.b16 %v2103, %v2102
    %v2117 = vpack.c.b16 %v2105, %v2104
    %v2118 = vpack.c.b16 %v2107, %v2106
    %v2119 = vpack.c.b16 %v2109, %v2108
    %v2120 = vpack.c.b16 %v2111, %v2110
    %v2121 = vpack.c.b16 %v2113, %v2112
    %2130 = vmatprep.subr.bf16.mxu0 0
    %2131 = vmatpush1.bf16.msra.mxu0 %v2114
    %2132 = vmatprep.subr.bf16.mxu0 0
    %2133 = vmatpush1.bf16.msra.mxu0 %v2115
    %2134 = vmatprep.subr.bf16.mxu0 0
    %2135 = vmatpush1.bf16.msra.mxu0 %v2116
    %2136 = vmatprep.subr.bf16.mxu0 0
    %2137 = vmatpush1.bf16.msra.mxu0 %v2117
    %2138 = vmatprep.subr.bf16.mxu0 0
    %2139 = vmatpush1.bf16.msra.mxu0 %v2118
    %2140 = vmatprep.subr.bf16.mxu0 0
    %2141 = vmatpush1.bf16.msra.mxu0 %v2119
    %2142 = vmatprep.subr.bf16.mxu0 0
    %2143 = vmatpush1.bf16.msra.mxu0 %v2120
    %2144 = vmatprep.subr.bf16.mxu0 0
    %2145 = vmatpush1.bf16.msra.mxu0 %v2121
    %2146 = vmatprep.subr.bf16.mxu0 0
    %2147 = vmatpush1.bf16.msra.mxu0 0
    %2148 = vmatprep.subr.bf16.mxu0 0
    %2149 = vmatpush1.bf16.msra.mxu0 0
    %2150 = vmatprep.subr.bf16.mxu0 0
    %2151 = vmatpush1.bf16.msra.mxu0 0
    %2152 = vmatprep.subr.bf16.mxu0 0
    %2153 = vmatpush1.bf16.msra.mxu0 0
    %2154 = vmatprep.subr.bf16.mxu0 0
    %2155 = vmatpush1.bf16.msra.mxu0 0
    %2156 = vmatprep.subr.bf16.mxu0 0
    %2157 = vmatpush1.bf16.msra.mxu0 0
    %2158 = vmatprep.subr.bf16.mxu0 0
    %2159 = vmatpush1.bf16.msra.mxu0 0
    %2160 = vmatprep.subr.bf16.mxu0 0
    %2161 = vmatpush1.bf16.msra.mxu0 0
    %2162 = vmatprep.mubr.bf16.mxu0 0
    %2163 = vmatmul.mubr.bf16.gmra.mrb[0].mxu0 %v2080
    %v2164 = vpop.f32.mrb[0].mxu0
    %v2165 = vadd.f32 %v2076, %v2164
    %v2166 = vpop.f32.mrb[0].mxu0
    %v2167 = vpop.f32.mrb[0].mxu0
    %v2168 = vadd.f32 %v2076, %v2167
    %v2169 = vpop.f32.mrb[0].mxu0
    %2170 = vdwg.mxu0
    %v2171 = vadd.f32 %v2165, %v2021
    %v2172 = vadd.f32 %v2168, %v2022
    %v2173 = vmax.f32 %v2171, 0.0
    %v2174 = vmax.f32 %v2172, 0.0
    %v2175 = vadd.f32 %v2173, %v2174
    %v2176 = vrot.slane %v2175, 4
    %v2177 = vadd.f32 %v2175, %v2176
    %v2178 = vrot.slane %v2177, 2
    %v2179 = vadd.f32 %v2177, %v2178
    %v2180 = vrot.slane %v2179, 1
    %v2181 = vadd.f32 %v2179, %v2180
    %v2182 = vmul.f32 %v2181, 0.0625
    %v2183 = vmul.f32 %v2173, %v2173
    %v2184 = vmul.f32 %v2174, %v2174
    %v2185 = vadd.f32 %v2183, %v2184
    %v2186 = vrot.slane %v2185, 4
    %v2187 = vadd.f32 %v2185, %v2186
    %v2188 = vrot.slane %v2187, 2
    %v2189 = vadd.f32 %v2187, %v2188
    %v2190 = vrot.slane %v2189, 1
    %v2191 = vadd.f32 %v2189, %v2190
    %v2192 = vmul.f32 %v2191, 0.0625
    %v2193 = vmul.f32 %v2182, %v2182
    %v2194 = vsub.f32 %v2192, %v2193
    %v2195 = vadd.f32 %v2194, 1e-05
    %v2196 = vrsqrt.pop %v2195
    %v2197 = vld [vmem:[%s10] sm:$0x1]
    %v2198 = vmul.f32 %v2196, %v2197
    %v2199 = vld [vmem:[%s11] sm:$0x1]
    %v2200 = vmul.f32 %v2182, %v2198
    %v2201 = vsub.f32 %v2199, %v2200
    %v2202 = vlaneseq
    %v2203 = vshrl.u32 %v2202, 7
    %v2204 = vsub.s32 0, %v2203
    %v2205 = vrot.slane %v2198, %v2204
    %v2206 = vmul.f32 %v2173, %v2205
    %v2207 = vmul.f32 %v2174, %v2205
    %v2209 = vlaneseq
    %v2210 = vshrl.u32 %v2209, 7
    %v2211 = vsub.s32 0, %v2210
    %v2212 = vrot.slane %v2201, %v2211
    %v2214 = vadd.f32 %v2206, %v2212
    %v2215 = vadd.f32 %v2207, %v2212
    %2216 = vst [vmem:[#allocation8] sm:$0xff] %v2214
    %2217 = vst [vmem:[#allocation8 + $0x8] sm:$0xff] %v2215
    // Predicated region
    $region58: #{tpu_custom_call.1} parent=1 // pred_check
      _
    $region59: #{tpu_custom_call.1} parent=1 // pred_check_branch
      %2219 = sbr.rel (0) target = $region61
    $region60: #{tpu_custom_call.1} parent=1 // pred_region
      %s2221 = ssub.s32 256, 256
      %2222 = vsyncadd [#allocation5], %s2221
      %s2223 = sshll.u32 [#allocation8], 4
      %s2224 = int_to_ptr.vmem [resolvable:$true] %s2223
      %2229 = dma.vmem_to_hbm [thread:$0]  %s2224, 256, %s12, [#allocation5], 128, 128, 8
    $region61: #{tpu_custom_call.1} parent=1 // pred_fallthru
      _
    // Predicated region
    $region62: #{tpu_custom_call.1} parent=1 // pred_check
      _
    $region63: #{tpu_custom_call.1} parent=1 // pred_check_branch
      %2231 = sbr.rel (0) target = $region65
    $region64: #{tpu_custom_call.1} parent=1 // pred_region
      %2232 = dma.done [#allocation5], 256
    $region65: #{tpu_custom_call.1} parent=1 // pred_fallthru
      _
    %2233 = vsyncpa [#allocation4], 1
    %2234 = vsyncpa [#allocation7], 1
    %2235 = vsyncpa [#allocation5], 1

</llo_original>
